<compile_context>
chip_gen: v6e
topology: v6e:2x2x1
jax: 0.10.0
libtpu: 0.0.40
codegen_flags: <defaults>
</compile_context>

<pallas_src>
import jax
import jax.numpy as jnp
from jax.experimental import pallas as pl
from jax.experimental.pallas import tpu as pltpu

B_BLK = 8  # batch rows per grid step -> full (8, D) sublane tiles for the recurrence


# ------------------------------ helpers -------------------------------------

def _layer_norm(x, gamma, beta, eps=1e-5):
    mu = jnp.mean(x, axis=-1, keepdims=True)
    var = jnp.mean((x - mu) ** 2, axis=-1, keepdims=True)
    return (x - mu) * jax.lax.rsqrt(var + eps) * gamma + beta


# --------------------- fused per-layer-streamed block kernel -----------------

def attention_stream_layers_kernel(
    x_ref,                 # (S, B_BLK, D)  embedded inputs for this batch block (const in l)
    dw_ref,                # (1, 1, D)      decay_net weight row, layer l
    db_ref,                # (L,) SMEM      decay_net biases
    ln1g_ref, ln1b_ref,    # (1, 1, D)      SequenceMergingSeq LayerNorm, layer l
    wrv_ref,               # (1, D, 2D)     fused [Wr.T | Wv.T], layer l
    brv_ref,               # (1, 1, 2D)     fused [br | bv], layer l
    ln2g_ref, ln2b_ref,    # (1, 1, D)      StateCoupling LayerNorm, layer l
    out_ref,               # (B_BLK, D)     last-position hidden state (written at l==L-1)
    x_scr,                 # VMEM (S*B_BLK, D)  residual stream carried across layers
    sb_scr,                # VMEM (S*B_BLK, D)  exp(x)*x, overwritten in-place with merged
    sa_scr,                # VMEM (S*B_BLK, 1)  row-sum of exp(x)
    dec_scr,               # VMEM (S*B_BLK, 1)  sigmoid decay
):
    S, B_blk, D = x_ref.shape
    N = S * B_blk
    l = pl.program_id(1)

    @pl.when(l == 0)
    def _init():
        # (S, 8, D) -> (S*8, D) is layout-preserving (B_BLK == sublane group); ~free.
        x_scr[...] = x_ref[...].reshape(N, D)

    x = x_scr[...]                                   # (N, D) f32
    dw = dw_ref[0]                                   # (1, D)
    db = db_ref[l]                                   # scalar from SMEM

    # ---- vectorized pre-work: full-tile EUP/XLU/VPU, hoisted out of the serial path ----
    e = jnp.exp(x)                                   # (N, D)
    sa_scr[...] = jnp.sum(e, axis=-1, keepdims=True)                       # (N, 1)
    sb_scr[...] = e * x                                                    # (N, D)
    dec_scr[...] = jax.nn.sigmoid(jnp.sum(x * dw, axis=-1, keepdims=True) + db)

    # ---- serial linear recurrence over t, vectorized over the batch block --------------
    # a_t = d_t*a_{t-1} + sum(exp x_t);  b_t = d_t*b_{t-1} + exp(x_t)*x_t
    # merged_t = b_t / (a_t + 1e-8), written in place over sb_scr (one (8,D) store/step).
    def step(t, carry):
        a, b = carry                                 # (B_blk, 1), (B_blk, D)
        row = t * B_blk
        d_t = dec_scr[pl.ds(row, B_blk), :]
        a = d_t * a + sa_scr[pl.ds(row, B_blk), :]
        b = d_t * b + sb_scr[pl.ds(row, B_blk), :]
        sb_scr[pl.ds(row, B_blk), :] = b / (a + 1e-8)
        return a, b

    # TODO(synk): for large S, use a chunked scan (within-chunk cumprod/cumsum + carried
    # prefix) instead of unroll=True to keep code size and the serial chain bounded.
    jax.lax.fori_loop(
        0, S, step,
        (jnp.zeros((B_blk, 1), jnp.float32), jnp.zeros((B_blk, D), jnp.float32)),
        unroll=True)

    merged = _layer_norm(sb_scr[...], ln1g_ref[0], ln1b_ref[0])            # (N, D)

    # ---- StateCoupling: single fused (D, 2D) MXU projection over all N rows ------------
    # TODO(synk): on v6e/v7x cast merged / wrv to bf16 (f32 accumulation) for 2x MXU.
    proj = jnp.dot(merged, wrv_ref[0], preferred_element_type=jnp.float32) + brv_ref[0]
    coupled = _layer_norm(jax.nn.sigmoid(proj[:, :D]) * proj[:, D:],
                          ln2g_ref[0], ln2b_ref[0])

    # ---- residual (Shift(x, None) == x) -------------------------------------------------
    x_scr[...] = x + coupled

    @pl.when(l == pl.num_programs(1) - 1)
    def _emit():
        out_ref[...] = x_scr[pl.ds((S - 1) * B_blk, B_blk), :]


# ------------------------------ vocab head kernel -----------------------------

def fc_head_kernel(x_ref, w_ref, b_ref, o_ref):
    o_ref[...] = (jnp.dot(x_ref[...], w_ref[...],
                          preferred_element_type=jnp.float32) + b_ref[...])


def _fc_head(last_h, w_t, bias):
    Bp, D = last_h.shape
    V = w_t.shape[1]
    # Lane-dense vocab tiles (multiples of 128, ideally 512); toy V=64 -> one full block.
    if V % 512 == 0:
        tv = 512
    elif V % 256 == 0:
        tv = 256
    elif V % 128 == 0:
        tv = 128
    else:
        tv = V
    nj = V // tv
    return pl.pallas_call(
        fc_head_kernel,
        out_shape=jax.ShapeDtypeStruct((Bp, V), jnp.float32),
        grid=(nj,),
        in_specs=[pl.BlockSpec((Bp, D), lambda j: (0, 0)),
                  pl.BlockSpec((D, tv), lambda j: (0, j)),
                  pl.BlockSpec((1, tv), lambda j: (0, j))],
        out_specs=pl.BlockSpec((Bp, tv), lambda j: (0, j)),
        compiler_params=pltpu.CompilerParams(dimension_semantics=("parallel",)),
    )(last_h, w_t, bias)


# ------------------------------ wrapper --------------------------------------

def attention_stream_forward(tokens, params):
    emb = params["emb"]
    B, S = tokens.shape
    D = emb.shape[1]
    L, _, D2 = params["w_rv"].shape

    # Pad batch to a multiple of B_BLK and gather embeddings directly in (S, B_pad, D)
    # layout so each recurrence step reads a contiguous (B_BLK, D) tile.
    n_b = pl.cdiv(B, B_BLK)
    B_pad = n_b * B_BLK
    tok_t = jnp.zeros((S, B_pad), tokens.dtype).at[:, :B].set(tokens.T)
    x_t = emb[tok_t]                                  # (S, B_pad, D); gather stays in XLA

    grid_spec = pltpu.PrefetchScalarGridSpec(
        num_scalar_prefetch=0,
        grid=(n_b, L),                                # batch blocks (parallel) x layers
        in_specs=[
            pl.BlockSpec((S, B_BLK, D), lambda b, l: (0, b, 0)),   # x: const across l
            pl.BlockSpec((1, 1, D),     lambda b, l: (l, 0, 0)),   # decay_w (streamed)
            pl.BlockSpec(memory_space=pltpu.MemorySpace.SMEM),     # decay_b scalars
            pl.BlockSpec((1, 1, D),     lambda b, l: (l, 0, 0)),   # ln1 gamma
            pl.BlockSpec((1, 1, D),     lambda b, l: (l, 0, 0)),   # ln1 beta
            pl.BlockSpec((1, D, D2),    lambda b, l: (l, 0, 0)),   # fused Wrv (streamed)
            pl.BlockSpec((1, 1, D2),    lambda b, l: (l, 0, 0)),   # fused brv
            pl.BlockSpec((1, 1, D),     lambda b, l: (l, 0, 0)),   # ln2 gamma
            pl.BlockSpec((1, 1, D),     lambda b, l: (l, 0, 0)),   # ln2 beta
        ],
        out_specs=pl.BlockSpec((B_BLK, D), lambda b, l: (b, 0)),   # last-token hidden
        scratch_shapes=[
            pltpu.VMEM((S * B_BLK, D), jnp.float32),   # x residual stream (carried over l)
            pltpu.VMEM((S * B_BLK, D), jnp.float32),   # exp(x)*x -> merged (in place)
            pltpu.VMEM((S * B_BLK, 1), jnp.float32),   # row-sum of exp(x)
            pltpu.VMEM((S * B_BLK, 1), jnp.float32),   # sigmoid decay
        ],
    )

    # Explicit VMEM budget: 2x x-block, 2x per-layer weights, scratch, out block + headroom.
    est = 4 * (2 * S * B_BLK * D
               + 2 * (D * D2 + D2 + 5 * D)
               + 2 * S * B_BLK * D
               + 2 * S * B_BLK
               + 2 * B_BLK * D)
    vmem_limit = min(max(2 * est, 32 << 20), 100 << 20)

    last_h = pl.pallas_call(
        attention_stream_layers_kernel,
        out_shape=jax.ShapeDtypeStruct((B_pad, D), jnp.float32),
        grid_spec=grid_spec,
        compiler_params=pltpu.CompilerParams(
            dimension_semantics=("parallel", "arbitrary"),
            vmem_limit_bytes=vmem_limit),
    )(x_t, params["decay_w"], params["decay_b"],
      params["ln1_g"], params["ln1_b"],
      params["w_rv"], params["b_rv"],
      params["ln2_g"], params["ln2_b"])

    logits = _fc_head(last_h, params["fc_w_t"], params["fc_b"])   # (B_pad, V)
    return logits[:B]


# ------------------------------ pure-JAX reference ----------------------------

def reference_forward(tokens, params):
    x = params["emb"][tokens]
    B, S, D = x.shape
    L = params["decay_w"].shape[0]
    for l in range(L):
        dw = params["decay_w"][l]                    # (1, D)
        db = params["decay_b"][l]                    # scalar
        a = jnp.zeros((B, 1), jnp.float32)
        b = jnp.zeros((B, D), jnp.float32)
        outs = []
        for t in range(S):
            x_t = x[:, t, :]
            decay = jax.nn.sigmoid(jnp.sum(x_t * dw, axis=1, keepdims=True) + db)
            e = jnp.exp(x_t)
            a = decay * a + jnp.sum(e, axis=1, keepdims=True)
            b = decay * b + e * x_t
            outs.append(b / (a + 1e-8))
        merged = jnp.stack(outs, axis=1)
        merged = _layer_norm(merged, params["ln1_g"][l], params["ln1_b"][l])
        proj = merged @ params["w_rv"][l] + params["b_rv"][l]
        gate = jax.nn.sigmoid(proj[..., :D])
        value = proj[..., D:]
        coupled = _layer_norm(gate * value, params["ln2_g"][l], params["ln2_b"][l])
        x = x + coupled
    return x[:, -1, :] @ params["fc_w_t"] + params["fc_b"]


# ------------------------------ parameter init --------------------------------

def init_params(key, vocab_size, D, num_layers=1):
    k = float(D) ** -0.5
    keys = jax.random.split(key, 4)
    emb = jax.random.normal(keys[0], (vocab_size, D), jnp.float32)   # nn.Embedding ~ N(0,1)

    def uni(kk, shape):
        return jax.random.uniform(kk, shape, jnp.float32, -k, k)

    dws, dbs, wrvs, brvs = [], [], [], []
    lkeys = jax.random.split(keys[1], num_layers)
    for i in range(num_layers):
        bk = jax.random.split(lkeys[i], 6)
        dws.append(uni(bk[0], (1, D)))               # Linear(D,1).weight row
        dbs.append(uni(bk[1], ()))                   # Linear(D,1).bias
        wr_t = uni(bk[2], (D, D)).T                  # pre-transposed: x @ W.T
        wv_t = uni(bk[4], (D, D)).T
        wrvs.append(jnp.concatenate([wr_t, wv_t], axis=-1))             # (D, 2D) fused
        brvs.append(jnp.concatenate([uni(bk[3], (1, D)),
                                     uni(bk[5], (1, D))], axis=-1))     # (1, 2D)

    return dict(
        emb=emb,
        decay_w=jnp.stack(dws),                      # (L, 1, D)
        decay_b=jnp.stack(dbs),                      # (L,)
        ln1_g=jnp.ones((num_layers, 1, D), jnp.float32),
        ln1_b=jnp.zeros((num_layers, 1, D), jnp.float32),
        w_rv=jnp.stack(wrvs),                        # (L, D, 2D)
        b_rv=jnp.stack(brvs),                        # (L, 1, 2D)
        ln2_g=jnp.ones((num_layers, 1, D), jnp.float32),
        ln2_b=jnp.zeros((num_layers, 1, D), jnp.float32),
        fc_w_t=uni(keys[2], (vocab_size, D)).T,      # (D, V)
        fc_b=uni(keys[3], (1, vocab_size)),          # (1, V)
    )


# ---------------------------------- main ---------------------------------------

if __name__ == "__main__":
    # TODO(synk): real models should pick D (and V) as multiples of 128 so vregs/MXU tiles
    # are fully used; the toy D=32 / V=64 here follow the module spec's small sizes.
    B, S, D, V = 2, 8, 32, 64          # batch, seq, embedding_dim, vocab_size
    key = jax.random.PRNGKey(0)
    params = init_params(key, V, D, num_layers=2)
    tokens = jax.random.randint(jax.random.fold_in(key, 999), (B, S), 0, V, dtype=jnp.int32)

    logits = attention_stream_forward(tokens, params)
    logits = jax.block_until_ready(logits)

    ref = reference_forward(tokens, params)
    assert logits.shape == (B, V) and logits.dtype == jnp.float32
    assert bool(jnp.all(jnp.isfinite(logits)))
    assert bool(jnp.allclose(logits, ref, atol=1e-3, rtol=1e-3)), \
        float(jnp.max(jnp.abs(logits - ref)))
    print("KERNEL_OK")
</pallas_src>

<mosaic_0001>
module attributes {stable_mosaic.version = 11 : i64} {
  func.func @attention_stream_layers_kernel(%arg0: i32, %arg1: i32, %arg2: memref<8x8x32xf32, #tpu.memory_space<vmem>>, %arg3: memref<1x1x32xf32, #tpu.memory_space<vmem>>, %arg4: memref<2xf32, #tpu.memory_space<smem>>, %arg5: memref<1x1x32xf32, #tpu.memory_space<vmem>>, %arg6: memref<1x1x32xf32, #tpu.memory_space<vmem>>, %arg7: memref<1x32x64xf32, #tpu.memory_space<vmem>>, %arg8: memref<1x1x64xf32, #tpu.memory_space<vmem>>, %arg9: memref<1x1x32xf32, #tpu.memory_space<vmem>>, %arg10: memref<1x1x32xf32, #tpu.memory_space<vmem>>, %arg11: memref<8x32xf32, #tpu.memory_space<vmem>>, %arg12: memref<64x32xf32, #tpu.memory_space<vmem>>, %arg13: memref<64x32xf32, #tpu.memory_space<vmem>>, %arg14: memref<64x1xf32, #tpu.memory_space<vmem>>, %arg15: memref<64x1xf32, #tpu.memory_space<vmem>>) attributes {dimension_semantics = [#tpu.dimension_semantics<parallel>, #tpu.dimension_semantics<arbitrary>], iteration_bounds = array<i64: 1, 2>, scalar_prefetch = 0 : i64, scratch_operands = 4 : i64, tpu.core_type = #tpu.core_type<tc>, window_params = [{transform_indices = @transform_0, window_bounds = array<i64: 8, 8, 32>}, {transform_indices = @transform_1, window_bounds = array<i64: 1, 1, 32>}, {transform_indices = @transform_2, window_bounds = array<i64: 2>}, {transform_indices = @transform_3, window_bounds = array<i64: 1, 1, 32>}, {transform_indices = @transform_4, window_bounds = array<i64: 1, 1, 32>}, {transform_indices = @transform_5, window_bounds = array<i64: 1, 32, 64>}, {transform_indices = @transform_6, window_bounds = array<i64: 1, 1, 64>}, {transform_indices = @transform_7, window_bounds = array<i64: 1, 1, 32>}, {transform_indices = @transform_8, window_bounds = array<i64: 1, 1, 32>}, {transform_indices = @transform_9, window_bounds = array<i64: 8, 32>}]} {
    %c0_i32 = arith.constant 0 : i32
    %0 = arith.cmpi eq, %arg1, %c0_i32 : i32
    %1 = arith.extui %0 : i1 to i32
    %c0_i32_0 = arith.constant 0 : i32
    %2 = arith.cmpi ne, %1, %c0_i32_0 : i32
    scf.if %2 {
      %c0_100 = arith.constant 0 : index
      %c0_101 = arith.constant 0 : index
      %c0_102 = arith.constant 0 : index
      %245 = vector.load %arg2[%c0_100, %c0_101, %c0_102] : memref<8x8x32xf32, #tpu.memory_space<vmem>>, vector<8x8x32xf32>
      %246 = vector.shape_cast %245 : vector<8x8x32xf32> to vector<64x32xf32>
      %c0_103 = arith.constant 0 : index
      %c0_104 = arith.constant 0 : index
      %247 = vector.load %arg12[%c0_103, %c0_104] : memref<64x32xf32, #tpu.memory_space<vmem>>, vector<64x32xf32>
      tpu.vector_store %arg12[%c0_103, %c0_104], %246 {strides = array<i32>} : memref<64x32xf32, #tpu.memory_space<vmem>>, vector<64x32xf32>,
    } else {
    }
    %c0 = arith.constant 0 : index
    %c0_1 = arith.constant 0 : index
    %3 = vector.load %arg12[%c0, %c0_1] : memref<64x32xf32, #tpu.memory_space<vmem>>, vector<64x32xf32>
    %c0_2 = arith.constant 0 : index
    %c0_3 = arith.constant 0 : index
    %c0_4 = arith.constant 0 : index
    %4 = vector.load %arg3[%c0_2, %c0_3, %c0_4] : memref<1x1x32xf32, #tpu.memory_space<vmem>>, vector<1x1x32xf32>
    %5 = vector.shape_cast %4 : vector<1x1x32xf32> to vector<1x32xf32>
    %6 = arith.index_cast %arg1 : i32 to index
    %7 = memref.load %arg4[%6] : memref<2xf32, #tpu.memory_space<smem>>
    %8 = math.exp %3 : vector<64x32xf32>
    %cst = arith.constant dense<0.000000e+00> : vector<64xf32>
    %9 = vector.multi_reduction <add>, %8, %cst [1] : vector<64x32xf32> to vector<64xf32>
    %10 = vector.shape_cast %9 : vector<64xf32> to vector<64x1xf32>
    %c0_5 = arith.constant 0 : index
    %c0_6 = arith.constant 0 : index
    %11 = vector.load %arg14[%c0_5, %c0_6] : memref<64x1xf32, #tpu.memory_space<vmem>>, vector<64x1xf32>
    tpu.vector_store %arg14[%c0_5, %c0_6], %10 {strides = array<i32>} : memref<64x1xf32, #tpu.memory_space<vmem>>, vector<64x1xf32>,
    %12 = arith.mulf %8, %3 : vector<64x32xf32>
    %c0_7 = arith.constant 0 : index
    %c0_8 = arith.constant 0 : index
    %13 = vector.load %arg13[%c0_7, %c0_8] : memref<64x32xf32, #tpu.memory_space<vmem>>, vector<64x32xf32>
    tpu.vector_store %arg13[%c0_7, %c0_8], %12 {strides = array<i32>} : memref<64x32xf32, #tpu.memory_space<vmem>>, vector<64x32xf32>,
    %14 = vector.broadcast %5 : vector<1x32xf32> to vector<64x32xf32>
    %15 = arith.mulf %3, %14 : vector<64x32xf32>
    %cst_9 = arith.constant dense<0.000000e+00> : vector<64xf32>
    %16 = vector.multi_reduction <add>, %15, %cst_9 [1] : vector<64x32xf32> to vector<64xf32>
    %17 = vector.shape_cast %16 : vector<64xf32> to vector<64x1xf32>
    %18 = vector.broadcast %7 : f32 to vector<64x1xf32>
    %19 = arith.addf %17, %18 : vector<64x1xf32>
    %20 = arith.negf %19 : vector<64x1xf32>
    %21 = math.exp %20 : vector<64x1xf32>
    %cst_10 = arith.constant 1.000000e+00 : f32
    %22 = vector.broadcast %cst_10 : f32 to vector<64x1xf32>
    %23 = arith.addf %22, %21 : vector<64x1xf32>
    %24 = arith.divf %22, %23 : vector<64x1xf32>
    %c0_11 = arith.constant 0 : index
    %c0_12 = arith.constant 0 : index
    %25 = vector.load %arg15[%c0_11, %c0_12] : memref<64x1xf32, #tpu.memory_space<vmem>>, vector<64x1xf32>
    tpu.vector_store %arg15[%c0_11, %c0_12], %24 {strides = array<i32>} : memref<64x1xf32, #tpu.memory_space<vmem>>, vector<64x1xf32>,
    %cst_13 = arith.constant 0.000000e+00 : f32
    %26 = vector.broadcast %cst_13 : f32 to vector<8x1xf32>
    %cst_14 = arith.constant 0.000000e+00 : f32
    %27 = vector.broadcast %cst_14 : f32 to vector<8x32xf32>
    %c0_i32_15 = arith.constant 0 : i32
    %c8_i32 = arith.constant 8 : i32
    %28 = arith.muli %c0_i32_15, %c8_i32 : i32
    %29 = arith.index_cast %28 : i32 to index
    %c0_16 = arith.constant 0 : index
    %30 = vector.load %arg15[%29, %c0_16] : memref<64x1xf32, #tpu.memory_space<vmem>>, vector<8x1xf32>
    %31 = arith.mulf %30, %26 : vector<8x1xf32>
    %32 = arith.index_cast %28 : i32 to index
    %c0_17 = arith.constant 0 : index
    %33 = vector.load %arg14[%32, %c0_17] : memref<64x1xf32, #tpu.memory_space<vmem>>, vector<8x1xf32>
    %34 = arith.addf %31, %33 : vector<8x1xf32>
    %35 = vector.broadcast %30 : vector<8x1xf32> to vector<8x32xf32>
    %36 = arith.mulf %35, %27 : vector<8x32xf32>
    %37 = arith.index_cast %28 : i32 to index
    %c0_18 = arith.constant 0 : index
    %38 = vector.load %arg13[%37, %c0_18] : memref<64x32xf32, #tpu.memory_space<vmem>>, vector<8x32xf32>
    %39 = arith.addf %36, %38 : vector<8x32xf32>
    %cst_19 = arith.constant 9.99999993E-9 : f32
    %40 = vector.broadcast %cst_19 : f32 to vector<8x1xf32>
    %41 = arith.addf %34, %40 : vector<8x1xf32>
    %42 = vector.broadcast %41 : vector<8x1xf32> to vector<8x32xf32>
    %43 = arith.divf %39, %42 : vector<8x32xf32>
    %44 = arith.index_cast %28 : i32 to index
    %c0_20 = arith.constant 0 : index
    %45 = vector.load %arg13[%44, %c0_20] : memref<64x32xf32, #tpu.memory_space<vmem>>, vector<8x32xf32>
    tpu.vector_store %arg13[%44, %c0_20], %43 {strides = array<i32>} : memref<64x32xf32, #tpu.memory_space<vmem>>, vector<8x32xf32>,
    %c1_i32 = arith.constant 1 : i32
    %c8_i32_21 = arith.constant 8 : i32
    %46 = arith.muli %c1_i32, %c8_i32_21 : i32
    %47 = arith.index_cast %46 : i32 to index
    %c0_22 = arith.constant 0 : index
    %48 = vector.load %arg15[%47, %c0_22] : memref<64x1xf32, #tpu.memory_space<vmem>>, vector<8x1xf32>
    %49 = arith.mulf %48, %34 : vector<8x1xf32>
    %50 = arith.index_cast %46 : i32 to index
    %c0_23 = arith.constant 0 : index
    %51 = vector.load %arg14[%50, %c0_23] : memref<64x1xf32, #tpu.memory_space<vmem>>, vector<8x1xf32>
    %52 = arith.addf %49, %51 : vector<8x1xf32>
    %53 = vector.broadcast %48 : vector<8x1xf32> to vector<8x32xf32>
    %54 = arith.mulf %53, %39 : vector<8x32xf32>
    %55 = arith.index_cast %46 : i32 to index
    %c0_24 = arith.constant 0 : index
    %56 = vector.load %arg13[%55, %c0_24] : memref<64x32xf32, #tpu.memory_space<vmem>>, vector<8x32xf32>
    %57 = arith.addf %54, %56 : vector<8x32xf32>
    %cst_25 = arith.constant 9.99999993E-9 : f32
    %58 = vector.broadcast %cst_25 : f32 to vector<8x1xf32>
    %59 = arith.addf %52, %58 : vector<8x1xf32>
    %60 = vector.broadcast %59 : vector<8x1xf32> to vector<8x32xf32>
    %61 = arith.divf %57, %60 : vector<8x32xf32>
    %62 = arith.index_cast %46 : i32 to index
    %c0_26 = arith.constant 0 : index
    %63 = vector.load %arg13[%62, %c0_26] : memref<64x32xf32, #tpu.memory_space<vmem>>, vector<8x32xf32>
    tpu.vector_store %arg13[%62, %c0_26], %61 {strides = array<i32>} : memref<64x32xf32, #tpu.memory_space<vmem>>, vector<8x32xf32>,
    %c2_i32 = arith.constant 2 : i32
    %c8_i32_27 = arith.constant 8 : i32
    %64 = arith.muli %c2_i32, %c8_i32_27 : i32
    %65 = arith.index_cast %64 : i32 to index
    %c0_28 = arith.constant 0 : index
    %66 = vector.load %arg15[%65, %c0_28] : memref<64x1xf32, #tpu.memory_space<vmem>>, vector<8x1xf32>
    %67 = arith.mulf %66, %52 : vector<8x1xf32>
    %68 = arith.index_cast %64 : i32 to index
    %c0_29 = arith.constant 0 : index
    %69 = vector.load %arg14[%68, %c0_29] : memref<64x1xf32, #tpu.memory_space<vmem>>, vector<8x1xf32>
    %70 = arith.addf %67, %69 : vector<8x1xf32>
    %71 = vector.broadcast %66 : vector<8x1xf32> to vector<8x32xf32>
    %72 = arith.mulf %71, %57 : vector<8x32xf32>
    %73 = arith.index_cast %64 : i32 to index
    %c0_30 = arith.constant 0 : index
    %74 = vector.load %arg13[%73, %c0_30] : memref<64x32xf32, #tpu.memory_space<vmem>>, vector<8x32xf32>
    %75 = arith.addf %72, %74 : vector<8x32xf32>
    %cst_31 = arith.constant 9.99999993E-9 : f32
    %76 = vector.broadcast %cst_31 : f32 to vector<8x1xf32>
    %77 = arith.addf %70, %76 : vector<8x1xf32>
    %78 = vector.broadcast %77 : vector<8x1xf32> to vector<8x32xf32>
    %79 = arith.divf %75, %78 : vector<8x32xf32>
    %80 = arith.index_cast %64 : i32 to index
    %c0_32 = arith.constant 0 : index
    %81 = vector.load %arg13[%80, %c0_32] : memref<64x32xf32, #tpu.memory_space<vmem>>, vector<8x32xf32>
    tpu.vector_store %arg13[%80, %c0_32], %79 {strides = array<i32>} : memref<64x32xf32, #tpu.memory_space<vmem>>, vector<8x32xf32>,
    %c3_i32 = arith.constant 3 : i32
    %c8_i32_33 = arith.constant 8 : i32
    %82 = arith.muli %c3_i32, %c8_i32_33 : i32
    %83 = arith.index_cast %82 : i32 to index
    %c0_34 = arith.constant 0 : index
    %84 = vector.load %arg15[%83, %c0_34] : memref<64x1xf32, #tpu.memory_space<vmem>>, vector<8x1xf32>
    %85 = arith.mulf %84, %70 : vector<8x1xf32>
    %86 = arith.index_cast %82 : i32 to index
    %c0_35 = arith.constant 0 : index
    %87 = vector.load %arg14[%86, %c0_35] : memref<64x1xf32, #tpu.memory_space<vmem>>, vector<8x1xf32>
    %88 = arith.addf %85, %87 : vector<8x1xf32>
    %89 = vector.broadcast %84 : vector<8x1xf32> to vector<8x32xf32>
    %90 = arith.mulf %89, %75 : vector<8x32xf32>
    %91 = arith.index_cast %82 : i32 to index
    %c0_36 = arith.constant 0 : index
    %92 = vector.load %arg13[%91, %c0_36] : memref<64x32xf32, #tpu.memory_space<vmem>>, vector<8x32xf32>
    %93 = arith.addf %90, %92 : vector<8x32xf32>
    %cst_37 = arith.constant 9.99999993E-9 : f32
    %94 = vector.broadcast %cst_37 : f32 to vector<8x1xf32>
    %95 = arith.addf %88, %94 : vector<8x1xf32>
    %96 = vector.broadcast %95 : vector<8x1xf32> to vector<8x32xf32>
    %97 = arith.divf %93, %96 : vector<8x32xf32>
    %98 = arith.index_cast %82 : i32 to index
    %c0_38 = arith.constant 0 : index
    %99 = vector.load %arg13[%98, %c0_38] : memref<64x32xf32, #tpu.memory_space<vmem>>, vector<8x32xf32>
    tpu.vector_store %arg13[%98, %c0_38], %97 {strides = array<i32>} : memref<64x32xf32, #tpu.memory_space<vmem>>, vector<8x32xf32>,
    %c4_i32 = arith.constant 4 : i32
    %c8_i32_39 = arith.constant 8 : i32
    %100 = arith.muli %c4_i32, %c8_i32_39 : i32
    %101 = arith.index_cast %100 : i32 to index
    %c0_40 = arith.constant 0 : index
    %102 = vector.load %arg15[%101, %c0_40] : memref<64x1xf32, #tpu.memory_space<vmem>>, vector<8x1xf32>
    %103 = arith.mulf %102, %88 : vector<8x1xf32>
    %104 = arith.index_cast %100 : i32 to index
    %c0_41 = arith.constant 0 : index
    %105 = vector.load %arg14[%104, %c0_41] : memref<64x1xf32, #tpu.memory_space<vmem>>, vector<8x1xf32>
    %106 = arith.addf %103, %105 : vector<8x1xf32>
    %107 = vector.broadcast %102 : vector<8x1xf32> to vector<8x32xf32>
    %108 = arith.mulf %107, %93 : vector<8x32xf32>
    %109 = arith.index_cast %100 : i32 to index
    %c0_42 = arith.constant 0 : index
    %110 = vector.load %arg13[%109, %c0_42] : memref<64x32xf32, #tpu.memory_space<vmem>>, vector<8x32xf32>
    %111 = arith.addf %108, %110 : vector<8x32xf32>
    %cst_43 = arith.constant 9.99999993E-9 : f32
    %112 = vector.broadcast %cst_43 : f32 to vector<8x1xf32>
    %113 = arith.addf %106, %112 : vector<8x1xf32>
    %114 = vector.broadcast %113 : vector<8x1xf32> to vector<8x32xf32>
    %115 = arith.divf %111, %114 : vector<8x32xf32>
    %116 = arith.index_cast %100 : i32 to index
    %c0_44 = arith.constant 0 : index
    %117 = vector.load %arg13[%116, %c0_44] : memref<64x32xf32, #tpu.memory_space<vmem>>, vector<8x32xf32>
    tpu.vector_store %arg13[%116, %c0_44], %115 {strides = array<i32>} : memref<64x32xf32, #tpu.memory_space<vmem>>, vector<8x32xf32>,
    %c5_i32 = arith.constant 5 : i32
    %c8_i32_45 = arith.constant 8 : i32
    %118 = arith.muli %c5_i32, %c8_i32_45 : i32
    %119 = arith.index_cast %118 : i32 to index
    %c0_46 = arith.constant 0 : index
    %120 = vector.load %arg15[%119, %c0_46] : memref<64x1xf32, #tpu.memory_space<vmem>>, vector<8x1xf32>
    %121 = arith.mulf %120, %106 : vector<8x1xf32>
    %122 = arith.index_cast %118 : i32 to index
    %c0_47 = arith.constant 0 : index
    %123 = vector.load %arg14[%122, %c0_47] : memref<64x1xf32, #tpu.memory_space<vmem>>, vector<8x1xf32>
    %124 = arith.addf %121, %123 : vector<8x1xf32>
    %125 = vector.broadcast %120 : vector<8x1xf32> to vector<8x32xf32>
    %126 = arith.mulf %125, %111 : vector<8x32xf32>
    %127 = arith.index_cast %118 : i32 to index
    %c0_48 = arith.constant 0 : index
    %128 = vector.load %arg13[%127, %c0_48] : memref<64x32xf32, #tpu.memory_space<vmem>>, vector<8x32xf32>
    %129 = arith.addf %126, %128 : vector<8x32xf32>
    %cst_49 = arith.constant 9.99999993E-9 : f32
    %130 = vector.broadcast %cst_49 : f32 to vector<8x1xf32>
    %131 = arith.addf %124, %130 : vector<8x1xf32>
    %132 = vector.broadcast %131 : vector<8x1xf32> to vector<8x32xf32>
    %133 = arith.divf %129, %132 : vector<8x32xf32>
    %134 = arith.index_cast %118 : i32 to index
    %c0_50 = arith.constant 0 : index
    %135 = vector.load %arg13[%134, %c0_50] : memref<64x32xf32, #tpu.memory_space<vmem>>, vector<8x32xf32>
    tpu.vector_store %arg13[%134, %c0_50], %133 {strides = array<i32>} : memref<64x32xf32, #tpu.memory_space<vmem>>, vector<8x32xf32>,
    %c6_i32 = arith.constant 6 : i32
    %c8_i32_51 = arith.constant 8 : i32
    %136 = arith.muli %c6_i32, %c8_i32_51 : i32
    %137 = arith.index_cast %136 : i32 to index
    %c0_52 = arith.constant 0 : index
    %138 = vector.load %arg15[%137, %c0_52] : memref<64x1xf32, #tpu.memory_space<vmem>>, vector<8x1xf32>
    %139 = arith.mulf %138, %124 : vector<8x1xf32>
    %140 = arith.index_cast %136 : i32 to index
    %c0_53 = arith.constant 0 : index
    %141 = vector.load %arg14[%140, %c0_53] : memref<64x1xf32, #tpu.memory_space<vmem>>, vector<8x1xf32>
    %142 = arith.addf %139, %141 : vector<8x1xf32>
    %143 = vector.broadcast %138 : vector<8x1xf32> to vector<8x32xf32>
    %144 = arith.mulf %143, %129 : vector<8x32xf32>
    %145 = arith.index_cast %136 : i32 to index
    %c0_54 = arith.constant 0 : index
    %146 = vector.load %arg13[%145, %c0_54] : memref<64x32xf32, #tpu.memory_space<vmem>>, vector<8x32xf32>
    %147 = arith.addf %144, %146 : vector<8x32xf32>
    %cst_55 = arith.constant 9.99999993E-9 : f32
    %148 = vector.broadcast %cst_55 : f32 to vector<8x1xf32>
    %149 = arith.addf %142, %148 : vector<8x1xf32>
    %150 = vector.broadcast %149 : vector<8x1xf32> to vector<8x32xf32>
    %151 = arith.divf %147, %150 : vector<8x32xf32>
    %152 = arith.index_cast %136 : i32 to index
    %c0_56 = arith.constant 0 : index
    %153 = vector.load %arg13[%152, %c0_56] : memref<64x32xf32, #tpu.memory_space<vmem>>, vector<8x32xf32>
    tpu.vector_store %arg13[%152, %c0_56], %151 {strides = array<i32>} : memref<64x32xf32, #tpu.memory_space<vmem>>, vector<8x32xf32>,
    %c7_i32 = arith.constant 7 : i32
    %c8_i32_57 = arith.constant 8 : i32
    %154 = arith.muli %c7_i32, %c8_i32_57 : i32
    %155 = arith.index_cast %154 : i32 to index
    %c0_58 = arith.constant 0 : index
    %156 = vector.load %arg15[%155, %c0_58] : memref<64x1xf32, #tpu.memory_space<vmem>>, vector<8x1xf32>
    %157 = arith.mulf %156, %142 : vector<8x1xf32>
    %158 = arith.index_cast %154 : i32 to index
    %c0_59 = arith.constant 0 : index
    %159 = vector.load %arg14[%158, %c0_59] : memref<64x1xf32, #tpu.memory_space<vmem>>, vector<8x1xf32>
    %160 = arith.addf %157, %159 : vector<8x1xf32>
    %161 = vector.broadcast %156 : vector<8x1xf32> to vector<8x32xf32>
    %162 = arith.mulf %161, %147 : vector<8x32xf32>
    %163 = arith.index_cast %154 : i32 to index
    %c0_60 = arith.constant 0 : index
    %164 = vector.load %arg13[%163, %c0_60] : memref<64x32xf32, #tpu.memory_space<vmem>>, vector<8x32xf32>
    %165 = arith.addf %162, %164 : vector<8x32xf32>
    %cst_61 = arith.constant 9.99999993E-9 : f32
    %166 = vector.broadcast %cst_61 : f32 to vector<8x1xf32>
    %167 = arith.addf %160, %166 : vector<8x1xf32>
    %168 = vector.broadcast %167 : vector<8x1xf32> to vector<8x32xf32>
    %169 = arith.divf %165, %168 : vector<8x32xf32>
    %170 = arith.index_cast %154 : i32 to index
    %c0_62 = arith.constant 0 : index
    %171 = vector.load %arg13[%170, %c0_62] : memref<64x32xf32, #tpu.memory_space<vmem>>, vector<8x32xf32>
    tpu.vector_store %arg13[%170, %c0_62], %169 {strides = array<i32>} : memref<64x32xf32, #tpu.memory_space<vmem>>, vector<8x32xf32>,
    %c8_i32_63 = arith.constant 8 : i32
    %c0_64 = arith.constant 0 : index
    %c0_65 = arith.constant 0 : index
    %172 = vector.load %arg13[%c0_64, %c0_65] : memref<64x32xf32, #tpu.memory_space<vmem>>, vector<64x32xf32>
    %c0_66 = arith.constant 0 : index
    %c0_67 = arith.constant 0 : index
    %c0_68 = arith.constant 0 : index
    %173 = vector.load %arg5[%c0_66, %c0_67, %c0_68] : memref<1x1x32xf32, #tpu.memory_space<vmem>>, vector<1x1x32xf32>
    %174 = vector.shape_cast %173 : vector<1x1x32xf32> to vector<1x32xf32>
    %c0_69 = arith.constant 0 : index
    %c0_70 = arith.constant 0 : index
    %c0_71 = arith.constant 0 : index
    %175 = vector.load %arg6[%c0_69, %c0_70, %c0_71] : memref<1x1x32xf32, #tpu.memory_space<vmem>>, vector<1x1x32xf32>
    %176 = vector.shape_cast %175 : vector<1x1x32xf32> to vector<1x32xf32>
    %cst_72 = arith.constant dense<0.000000e+00> : vector<64xf32>
    %177 = vector.multi_reduction <add>, %172, %cst_72 [1] : vector<64x32xf32> to vector<64xf32>
    %178 = vector.shape_cast %177 : vector<64xf32> to vector<64x1xf32>
    %cst_73 = arith.constant 3.200000e+01 : f32
    %179 = vector.broadcast %cst_73 : f32 to vector<64x1xf32>
    %180 = arith.divf %178, %179 : vector<64x1xf32>
    %181 = vector.broadcast %180 : vector<64x1xf32> to vector<64x32xf32>
    %182 = arith.subf %172, %181 : vector<64x32xf32>
    %183 = arith.mulf %182, %182 : vector<64x32xf32>
    %cst_74 = arith.constant dense<0.000000e+00> : vector<64xf32>
    %184 = vector.multi_reduction <add>, %183, %cst_74 [1] : vector<64x32xf32> to vector<64xf32>
    %185 = vector.shape_cast %184 : vector<64xf32> to vector<64x1xf32>
    %cst_75 = arith.constant 3.200000e+01 : f32
    %186 = vector.broadcast %cst_75 : f32 to vector<64x1xf32>
    %187 = arith.divf %185, %186 : vector<64x1xf32>
    %188 = vector.broadcast %180 : vector<64x1xf32> to vector<64x32xf32>
    %189 = arith.subf %172, %188 : vector<64x32xf32>
    %cst_76 = arith.constant 9.99999974E-6 : f32
    %190 = vector.broadcast %cst_76 : f32 to vector<64x1xf32>
    %191 = arith.addf %187, %190 : vector<64x1xf32>
    %192 = math.rsqrt %191 : vector<64x1xf32>
    %193 = vector.broadcast %192 : vector<64x1xf32> to vector<64x32xf32>
    %194 = arith.mulf %189, %193 : vector<64x32xf32>
    %195 = vector.broadcast %174 : vector<1x32xf32> to vector<64x32xf32>
    %196 = arith.mulf %194, %195 : vector<64x32xf32>
    %197 = vector.broadcast %176 : vector<1x32xf32> to vector<64x32xf32>
    %198 = arith.addf %196, %197 : vector<64x32xf32>
    %c0_77 = arith.constant 0 : index
    %c0_78 = arith.constant 0 : index
    %c0_79 = arith.constant 0 : index
    %199 = vector.load %arg7[%c0_77, %c0_78, %c0_79] : memref<1x32x64xf32, #tpu.memory_space<vmem>>, vector<1x32x64xf32>
    %200 = vector.shape_cast %199 : vector<1x32x64xf32> to vector<32x64xf32>
    %cst_80 = arith.constant dense<0.000000e+00> : vector<64x64xf32>
    %201 = tpu.matmul %198, %200, %cst_80 {dimension_numbers = #tpu.dot_dimension_numbers<[1], [0], [0], [1], [0, 0, 1, 1], [], []>} : vector<64x32xf32>, vector<32x64xf32>, vector<64x64xf32> -> vector<64x64xf32>
    %c0_81 = arith.constant 0 : index
    %c0_82 = arith.constant 0 : index
    %c0_83 = arith.constant 0 : index
    %202 = vector.load %arg8[%c0_81, %c0_82, %c0_83] : memref<1x1x64xf32, #tpu.memory_space<vmem>>, vector<1x1x64xf32>
    %203 = vector.shape_cast %202 : vector<1x1x64xf32> to vector<1x64xf32>
    %204 = vector.broadcast %203 : vector<1x64xf32> to vector<64x64xf32>
    %205 = arith.addf %201, %204 : vector<64x64xf32>
    %206 = vector.extract_strided_slice %205 {offsets = [0, 0], sizes = [64, 32], strides = [1, 1]} : vector<64x64xf32> to vector<64x32xf32>
    %207 = arith.negf %206 : vector<64x32xf32>
    %208 = math.exp %207 : vector<64x32xf32>
    %cst_84 = arith.constant 1.000000e+00 : f32
    %209 = vector.broadcast %cst_84 : f32 to vector<64x32xf32>
    %210 = arith.addf %209, %208 : vector<64x32xf32>
    %211 = arith.divf %209, %210 : vector<64x32xf32>
    %212 = vector.extract_strided_slice %205 {offsets = [0, 32], sizes = [64, 32], strides = [1, 1]} : vector<64x64xf32> to vector<64x32xf32>
    %213 = arith.mulf %211, %212 : vector<64x32xf32>
    %c0_85 = arith.constant 0 : index
    %c0_86 = arith.constant 0 : index
    %c0_87 = arith.constant 0 : index
    %214 = vector.load %arg9[%c0_85, %c0_86, %c0_87] : memref<1x1x32xf32, #tpu.memory_space<vmem>>, vector<1x1x32xf32>
    %215 = vector.shape_cast %214 : vector<1x1x32xf32> to vector<1x32xf32>
    %c0_88 = arith.constant 0 : index
    %c0_89 = arith.constant 0 : index
    %c0_90 = arith.constant 0 : index
    %216 = vector.load %arg10[%c0_88, %c0_89, %c0_90] : memref<1x1x32xf32, #tpu.memory_space<vmem>>, vector<1x1x32xf32>
    %217 = vector.shape_cast %216 : vector<1x1x32xf32> to vector<1x32xf32>
    %cst_91 = arith.constant dense<0.000000e+00> : vector<64xf32>
    %218 = vector.multi_reduction <add>, %213, %cst_91 [1] : vector<64x32xf32> to vector<64xf32>
    %219 = vector.shape_cast %218 : vector<64xf32> to vector<64x1xf32>
    %cst_92 = arith.constant 3.200000e+01 : f32
    %220 = vector.broadcast %cst_92 : f32 to vector<64x1xf32>
    %221 = arith.divf %219, %220 : vector<64x1xf32>
    %222 = vector.broadcast %221 : vector<64x1xf32> to vector<64x32xf32>
    %223 = arith.subf %213, %222 : vector<64x32xf32>
    %224 = arith.mulf %223, %223 : vector<64x32xf32>
    %cst_93 = arith.constant dense<0.000000e+00> : vector<64xf32>
    %225 = vector.multi_reduction <add>, %224, %cst_93 [1] : vector<64x32xf32> to vector<64xf32>
    %226 = vector.shape_cast %225 : vector<64xf32> to vector<64x1xf32>
    %cst_94 = arith.constant 3.200000e+01 : f32
    %227 = vector.broadcast %cst_94 : f32 to vector<64x1xf32>
    %228 = arith.divf %226, %227 : vector<64x1xf32>
    %229 = vector.broadcast %221 : vector<64x1xf32> to vector<64x32xf32>
    %230 = arith.subf %213, %229 : vector<64x32xf32>
    %cst_95 = arith.constant 9.99999974E-6 : f32
    %231 = vector.broadcast %cst_95 : f32 to vector<64x1xf32>
    %232 = arith.addf %228, %231 : vector<64x1xf32>
    %233 = math.rsqrt %232 : vector<64x1xf32>
    %234 = vector.broadcast %233 : vector<64x1xf32> to vector<64x32xf32>
    %235 = arith.mulf %230, %234 : vector<64x32xf32>
    %236 = vector.broadcast %215 : vector<1x32xf32> to vector<64x32xf32>
    %237 = arith.mulf %235, %236 : vector<64x32xf32>
    %238 = vector.broadcast %217 : vector<1x32xf32> to vector<64x32xf32>
    %239 = arith.addf %237, %238 : vector<64x32xf32>
    %240 = arith.addf %3, %239 : vector<64x32xf32>
    %c0_96 = arith.constant 0 : index
    %c0_97 = arith.constant 0 : index
    %241 = vector.load %arg12[%c0_96, %c0_97] : memref<64x32xf32, #tpu.memory_space<vmem>>, vector<64x32xf32>
    tpu.vector_store %arg12[%c0_96, %c0_97], %240 {strides = array<i32>} : memref<64x32xf32, #tpu.memory_space<vmem>>, vector<64x32xf32>,
    %c1_i32_98 = arith.constant 1 : i32
    %242 = arith.cmpi eq, %arg1, %c1_i32_98 : i32
    %243 = arith.extui %242 : i1 to i32
    %c0_i32_99 = arith.constant 0 : i32
    %244 = arith.cmpi ne, %243, %c0_i32_99 : i32
    scf.if %244 {
      %c56 = arith.constant 56 : index
      %c0_100 = arith.constant 0 : index
      %245 = vector.load %arg12[%c56, %c0_100] : memref<64x32xf32, #tpu.memory_space<vmem>>, vector<8x32xf32>
      %c0_101 = arith.constant 0 : index
      %c0_102 = arith.constant 0 : index
      %246 = vector.load %arg11[%c0_101, %c0_102] : memref<8x32xf32, #tpu.memory_space<vmem>>, vector<8x32xf32>
      tpu.vector_store %arg11[%c0_101, %c0_102], %245 {strides = array<i32>} : memref<8x32xf32, #tpu.memory_space<vmem>>, vector<8x32xf32>,
    } else {
    }
    return
  }
  func.func @transform_0(%arg0: i32, %arg1: i32) -> (i32, i32, i32) {
    %c0_i32 = arith.constant 0 : i32
    %c0_i32_0 = arith.constant 0 : i32
    %c0_i32_1 = arith.constant 0 : i32
    return %c0_i32, %arg0, %c0_i32_0 : i32, i32, i32
  }
  func.func @transform_1(%arg0: i32, %arg1: i32) -> (i32, i32, i32) {
    %c0_i32 = arith.constant 0 : i32
    %c0_i32_0 = arith.constant 0 : i32
    %c0_i32_1 = arith.constant 0 : i32
    return %arg1, %c0_i32, %c0_i32_0 : i32, i32, i32
  }
  func.func @transform_2(%arg0: i32, %arg1: i32) -> i32 {
    %c0_i32 = arith.constant 0 : i32
    %c0_i32_0 = arith.constant 0 : i32
    return %c0_i32 : i32
  }
  func.func @transform_3(%arg0: i32, %arg1: i32) -> (i32, i32, i32) {
    %c0_i32 = arith.constant 0 : i32
    %c0_i32_0 = arith.constant 0 : i32
    %c0_i32_1 = arith.constant 0 : i32
    return %arg1, %c0_i32, %c0_i32_0 : i32, i32, i32
  }
  func.func @transform_4(%arg0: i32, %arg1: i32) -> (i32, i32, i32) {
    %c0_i32 = arith.constant 0 : i32
    %c0_i32_0 = arith.constant 0 : i32
    %c0_i32_1 = arith.constant 0 : i32
    return %arg1, %c0_i32, %c0_i32_0 : i32, i32, i32
  }
  func.func @transform_5(%arg0: i32, %arg1: i32) -> (i32, i32, i32) {
    %c0_i32 = arith.constant 0 : i32
    %c0_i32_0 = arith.constant 0 : i32
    %c0_i32_1 = arith.constant 0 : i32
    return %arg1, %c0_i32, %c0_i32_0 : i32, i32, i32
  }
  func.func @transform_6(%arg0: i32, %arg1: i32) -> (i32, i32, i32) {
    %c0_i32 = arith.constant 0 : i32
    %c0_i32_0 = arith.constant 0 : i32
    %c0_i32_1 = arith.constant 0 : i32
    return %arg1, %c0_i32, %c0_i32_0 : i32, i32, i32
  }
  func.func @transform_7(%arg0: i32, %arg1: i32) -> (i32, i32, i32) {
    %c0_i32 = arith.constant 0 : i32
    %c0_i32_0 = arith.constant 0 : i32
    %c0_i32_1 = arith.constant 0 : i32
    return %arg1, %c0_i32, %c0_i32_0 : i32, i32, i32
  }
  func.func @transform_8(%arg0: i32, %arg1: i32) -> (i32, i32, i32) {
    %c0_i32 = arith.constant 0 : i32
    %c0_i32_0 = arith.constant 0 : i32
    %c0_i32_1 = arith.constant 0 : i32
    return %arg1, %c0_i32, %c0_i32_0 : i32, i32, i32
  }
  func.func @transform_9(%arg0: i32, %arg1: i32) -> (i32, i32) {
    %c0_i32 = arith.constant 0 : i32
    %c0_i32_0 = arith.constant 0 : i32
    return %arg0, %c0_i32 : i32, i32
  }
}

</mosaic_0001>

<llo_original>
// kernel: tpu_custom_call.1
$region0: #{tpu_custom_call.1}
  #allocation0 [shape = 'u32[]', space=smem, size = 0x4, offset = 0x4, fixed_abs, tag = 'smem constant byte address 0x4 - core index']
  #allocation1 [shape = 'u32[144,128]{1,0:T(1,128)}', space=vmem, size = 0x12000, scoped, tag = 'internal scratch']
  #allocation2 [shape = 'f32[64,32]{1,0:T(8,128)}', space=vmem, size = 0x8000, scoped, tag = 'scratch operand']
  #allocation3 [shape = 'f32[64,32]{1,0:T(8,128)}', space=vmem, size = 0x8000, scoped, tag = 'scratch operand']
  #allocation4 [shape = 'f32[64,1]{1,0:T(8,128)}', space=vmem, size = 0x8000, scoped, tag = 'scratch operand']
  #allocation5 [shape = 'f32[64,1]{1,0:T(8,128)}', space=vmem, size = 0x8000, scoped, tag = 'scratch operand']
  %s0 = inlined_call_operand.hbm [shape: f32[8,8,32], index: 0, kind: input, shape index: {}]
  %s1 = inlined_call_operand.hbm [shape: f32[2,1,32], index: 1, kind: input, shape index: {}]
  %s2 = inlined_call_operand.hbm [shape: f32[2], index: 2, kind: input, shape index: {}]
  %s3 = inlined_call_operand.vmem [shape: f32[2,1,32], index: 3, kind: input, shape index: {}]
  %s4 = inlined_call_operand.vmem [shape: f32[2,1,32], index: 4, kind: input, shape index: {}]
  %s5 = inlined_call_operand.hbm [shape: f32[2,32,64], index: 5, kind: input, shape index: {}]
  %s6 = inlined_call_operand.vmem [shape: f32[2,1,64], index: 6, kind: input, shape index: {}]
  %s7 = inlined_call_operand.vmem [shape: f32[2,1,32], index: 7, kind: input, shape index: {}]
  %s8 = inlined_call_operand.vmem [shape: f32[2,1,32], index: 8, kind: input, shape index: {}]
  %s9 = inlined_call_operand.hbm [shape: f32[8,32], index: 9, kind: output, shape index: {}]
  %s10 = sld [smem:[#allocation0]]
  $region93: #{tpu_custom_call.1} parent=0
    _
  %s12 = ssub.s32 1, %s10
  %s13 = scalar_select 0, %s12, %s10
  $region1: #{tpu_custom_call.1} parent=0
    #allocation6 [shape = 'u8[32768]{0}', space=vmem, size = 0x8000, scoped, tag = 'input window, operand 0, single buffered']
    #allocation7 [shape = 's32[2]{0}', space=sflag, size = 0x8, scoped, tag = 'scoped memory for tpu_custom_call.1']
    #allocation8 [shape = 's32[2]{0}', space=sflag, size = 0x8, scoped, tag = 'scoped memory for tpu_custom_call.1']
    #allocation9 [shape = 's32[2]{0}', space=sflag, size = 0x8, scoped, tag = 'scoped memory for tpu_custom_call.1']
    #allocation10 [shape = 'u8[1024]{0}', space=vmem, size = 0x400, scoped, tag = 'input window, operand 1']
    #allocation11 [shape = 's32[2]{0}', space=sflag, size = 0x8, scoped, tag = 'scoped memory for tpu_custom_call.1']
    #allocation12 [shape = 'u8[512]{0}', space=smem, size = 0x200, scoped, tag = 'input window, operand 2, single buffered']
    #allocation13 [shape = 'u8[32768]{0}', space=vmem, size = 0x8000, scoped, tag = 'input window, operand 5']
    #allocation14 [shape = 'u8[4096]{0}', space=vmem, size = 0x1000, scoped, tag = 'output window, operand 0, single buffered']
    %14 = vsyncpa [#allocation7], 0
    %15 = vsyncpa [#allocation11], 0
    %s16 = scalar_lea.sflag [#allocation11], 1
    %17 = vsyncpa %s16, 0
    %18 = vsyncpa [#allocation9], 0
    %19 = vsyncpa [#allocation8], 0
    loop: start=0, step=1, limit=4
    $region2: #{tpu_custom_call.1} parent=1 // loop_pre_header
      _
    $region3: #{tpu_custom_call.1} parent=1 // loop_header
      %s21 = sphi 0, %s25
      %p22 = scmp.ge.s32.totalorder %s21, 4
      %s28 = sphi 0, %s40
      %s29 = sphi 0, %s36
      %s30 = sphi 0, %s28
      %s31 = sphi 0, %s29
      %s32 = sphi 0, %s30
      %s33 = sphi 0, %s31
      %s43 = sphi 0, %s45
      %s46 = sphi 0, %s43
      %s47 = sphi 0, %s46
      %s63 = sphi 0, %s47
      %s69 = sphi 0, %s71
      %s72 = sphi 0, %s69
      %s73 = sphi 0, %s72
      %s89 = sphi 0, %s73
      %s93 = sphi 0, %s93
      %s95 = sphi 0, %s93
      %s96 = sphi 0, %s95
      %s110 = sphi 0, %s96
      %s116 = sphi 0, %s118
      %s119 = sphi 0, %s116
      %s120 = sphi 0, %s119
      %s136 = sphi 0, %s120
      %s142 = sphi 0, %s144
      %s145 = sphi 0, %s142
      %s146 = sphi 0, %s145
      %s162 = sphi 0, %s146
      %s168 = sphi 0, %s170
      %s171 = sphi 0, %s168
      %s172 = sphi 0, %s171
      %s188 = sphi 0, %s172
      %s194 = sphi 0, %s196
      %s197 = sphi 0, %s194
      %s198 = sphi 0, %s197
      %s214 = sphi 0, %s198
      %s220 = sphi 0, %s222
      %s223 = sphi 0, %s220
      %s224 = sphi 0, %s223
      %s240 = sphi 0, %s224
      %s246 = sphi 0, %s248
      %s249 = sphi 0, %s246
      %s250 = sphi 0, %s249
      %s266 = sphi 0, %s250
      %s272 = sphi 0, %s274
      %s275 = sphi 0, %s272
      %s276 = sphi 0, %s275
      %s292 = sphi 0, %s276
    $region4: #{tpu_custom_call.1} parent=1 // loop_header_branch
      %24 = sbr.rel (%p22) target = $region8
    $region5: #{tpu_custom_call.1} parent=1 // loop_body
      %s26 = ssub.s32 %s21, 1
      %s27 = ssub.s32 %s21, 2
      %s34 = sadd.s32 1, %s29
      %p35 = scmp.ge.s32.totalorder %s34, 2
      %s36 = scalar_select %p35, 0, %s34
      %s37 = sadd.s32 1, %s28
      %s38 = scalar_select %p35, %s37, %s28
      %p39 = scmp.ge.s32.totalorder %s38, 1
      %s40 = scalar_select %p39, 0, %s38
      %s41 = ssub.s32 %s28, %s40
      %p42 = scmp.eq.s32.totalorder %s41, 0
      %s44 = sadd.s32 %s43, 1
      %s45 = scalar_select %p42, %s43, %s44
      %p48 = pneg %p42
      %p49 = scmp.eq.s32.totalorder %s21, 1
      %p50 = por %p48, %p49
      %p51 = scmp.ne.s32.totalorder %s43, %s46
      %p52 = scmp.eq.s32.totalorder %s21, 0
      %p53 = por %p51, %p52
      %p54 = scmp.ne.s32.totalorder %s43, %s46
      %p55 = scmp.eq.s32.totalorder %s26, 1
      %p56 = por %p54, %p55
      %p57 = scmp.ne.s32.totalorder %s46, %s47
      %p58 = scmp.eq.s32.totalorder %s26, 0
      %p59 = por %p57, %p58
      %p60 = scmp.ne.s32.totalorder %s46, %s47
      %p61 = scmp.eq.s32.totalorder %s27, 1
      %p62 = por %p60, %p61
      %p64 = scmp.ne.s32.totalorder %s47, %s63
      %p65 = scmp.eq.s32.totalorder %s27, 0
      %p66 = por %p64, %p65
      %s67 = ssub.s32 %s29, %s36
      %p68 = scmp.eq.s32.totalorder %s67, 0
      %s70 = sadd.s32 %s69, 1
      %s71 = scalar_select %p68, %s69, %s70
      %p74 = pneg %p68
      %p75 = scmp.eq.s32.totalorder %s21, 1
      %p76 = por %p74, %p75
      %p77 = scmp.ne.s32.totalorder %s69, %s72
      %p78 = scmp.eq.s32.totalorder %s21, 0
      %p79 = por %p77, %p78
      %p80 = scmp.ne.s32.totalorder %s69, %s72
      %p81 = scmp.eq.s32.totalorder %s26, 1
      %p82 = por %p80, %p81
      %p83 = scmp.ne.s32.totalorder %s72, %s73
      %p84 = scmp.eq.s32.totalorder %s26, 0
      %p85 = por %p83, %p84
      %p86 = scmp.ne.s32.totalorder %s72, %s73
      %p87 = scmp.eq.s32.totalorder %s27, 1
      %p88 = por %p86, %p87
      %p90 = scmp.ne.s32.totalorder %s73, %s89
      %p91 = scmp.eq.s32.totalorder %s27, 0
      %p92 = por %p90, %p91
      %s94 = sadd.s32 %s93, 1
      %p97 = scmp.eq.s32.totalorder %s21, 1
      %p98 = scmp.ne.s32.totalorder %s93, %s95
      %p99 = scmp.eq.s32.totalorder %s21, 0
      %p100 = por %p98, %p99
      %p101 = scmp.ne.s32.totalorder %s93, %s95
      %p102 = scmp.eq.s32.totalorder %s26, 1
      %p103 = por %p101, %p102
      %p104 = scmp.ne.s32.totalorder %s95, %s96
      %p105 = scmp.eq.s32.totalorder %s26, 0
      %p106 = por %p104, %p105
      %p107 = scmp.ne.s32.totalorder %s95, %s96
      %p108 = scmp.eq.s32.totalorder %s27, 1
      %p109 = por %p107, %p108
      %p111 = scmp.ne.s32.totalorder %s96, %s110
      %p112 = scmp.eq.s32.totalorder %s27, 0
      %p113 = por %p111, %p112
      %s114 = ssub.s32 %s29, %s36
      %p115 = scmp.eq.s32.totalorder %s114, 0
      %s117 = sadd.s32 %s116, 1
      %s118 = scalar_select %p115, %s116, %s117
      %p121 = pneg %p115
      %p122 = scmp.eq.s32.totalorder %s21, 1
      %p123 = por %p121, %p122
      %p124 = scmp.ne.s32.totalorder %s116, %s119
      %p125 = scmp.eq.s32.totalorder %s21, 0
      %p126 = por %p124, %p125
      %p127 = scmp.ne.s32.totalorder %s116, %s119
      %p128 = scmp.eq.s32.totalorder %s26, 1
      %p129 = por %p127, %p128
      %p130 = scmp.ne.s32.totalorder %s119, %s120
      %p131 = scmp.eq.s32.totalorder %s26, 0
      %p132 = por %p130, %p131
      %p133 = scmp.ne.s32.totalorder %s119, %s120
      %p134 = scmp.eq.s32.totalorder %s27, 1
      %p135 = por %p133, %p134
      %p137 = scmp.ne.s32.totalorder %s120, %s136
      %p138 = scmp.eq.s32.totalorder %s27, 0
      %p139 = por %p137, %p138
      %s140 = ssub.s32 %s29, %s36
      %p141 = scmp.eq.s32.totalorder %s140, 0
      %s143 = sadd.s32 %s142, 1
      %s144 = scalar_select %p141, %s142, %s143
      %p147 = pneg %p141
      %p148 = scmp.eq.s32.totalorder %s21, 1
      %p149 = por %p147, %p148
      %p150 = scmp.ne.s32.totalorder %s142, %s145
      %p151 = scmp.eq.s32.totalorder %s21, 0
      %p152 = por %p150, %p151
      %p153 = scmp.ne.s32.totalorder %s142, %s145
      %p154 = scmp.eq.s32.totalorder %s26, 1
      %p155 = por %p153, %p154
      %p156 = scmp.ne.s32.totalorder %s145, %s146
      %p157 = scmp.eq.s32.totalorder %s26, 0
      %p158 = por %p156, %p157
      %p159 = scmp.ne.s32.totalorder %s145, %s146
      %p160 = scmp.eq.s32.totalorder %s27, 1
      %p161 = por %p159, %p160
      %p163 = scmp.ne.s32.totalorder %s146, %s162
      %p164 = scmp.eq.s32.totalorder %s27, 0
      %p165 = por %p163, %p164
      %s166 = ssub.s32 %s29, %s36
      %p167 = scmp.eq.s32.totalorder %s166, 0
      %s169 = sadd.s32 %s168, 1
      %s170 = scalar_select %p167, %s168, %s169
      %p173 = pneg %p167
      %p174 = scmp.eq.s32.totalorder %s21, 1
      %p175 = por %p173, %p174
      %p176 = scmp.ne.s32.totalorder %s168, %s171
      %p177 = scmp.eq.s32.totalorder %s21, 0
      %p178 = por %p176, %p177
      %p179 = scmp.ne.s32.totalorder %s168, %s171
      %p180 = scmp.eq.s32.totalorder %s26, 1
      %p181 = por %p179, %p180
      %p182 = scmp.ne.s32.totalorder %s171, %s172
      %p183 = scmp.eq.s32.totalorder %s26, 0
      %p184 = por %p182, %p183
      %p185 = scmp.ne.s32.totalorder %s171, %s172
      %p186 = scmp.eq.s32.totalorder %s27, 1
      %p187 = por %p185, %p186
      %p189 = scmp.ne.s32.totalorder %s172, %s188
      %p190 = scmp.eq.s32.totalorder %s27, 0
      %p191 = por %p189, %p190
      %s192 = ssub.s32 %s29, %s36
      %p193 = scmp.eq.s32.totalorder %s192, 0
      %s195 = sadd.s32 %s194, 1
      %s196 = scalar_select %p193, %s194, %s195
      %p199 = pneg %p193
      %p200 = scmp.eq.s32.totalorder %s21, 1
      %p201 = por %p199, %p200
      %p202 = scmp.ne.s32.totalorder %s194, %s197
      %p203 = scmp.eq.s32.totalorder %s21, 0
      %p204 = por %p202, %p203
      %p205 = scmp.ne.s32.totalorder %s194, %s197
      %p206 = scmp.eq.s32.totalorder %s26, 1
      %p207 = por %p205, %p206
      %p208 = scmp.ne.s32.totalorder %s197, %s198
      %p209 = scmp.eq.s32.totalorder %s26, 0
      %p210 = por %p208, %p209
      %p211 = scmp.ne.s32.totalorder %s197, %s198
      %p212 = scmp.eq.s32.totalorder %s27, 1
      %p213 = por %p211, %p212
      %p215 = scmp.ne.s32.totalorder %s198, %s214
      %p216 = scmp.eq.s32.totalorder %s27, 0
      %p217 = por %p215, %p216
      %s218 = ssub.s32 %s29, %s36
      %p219 = scmp.eq.s32.totalorder %s218, 0
      %s221 = sadd.s32 %s220, 1
      %s222 = scalar_select %p219, %s220, %s221
      %p225 = pneg %p219
      %p226 = scmp.eq.s32.totalorder %s21, 1
      %p227 = por %p225, %p226
      %p228 = scmp.ne.s32.totalorder %s220, %s223
      %p229 = scmp.eq.s32.totalorder %s21, 0
      %p230 = por %p228, %p229
      %p231 = scmp.ne.s32.totalorder %s220, %s223
      %p232 = scmp.eq.s32.totalorder %s26, 1
      %p233 = por %p231, %p232
      %p234 = scmp.ne.s32.totalorder %s223, %s224
      %p235 = scmp.eq.s32.totalorder %s26, 0
      %p236 = por %p234, %p235
      %p237 = scmp.ne.s32.totalorder %s223, %s224
      %p238 = scmp.eq.s32.totalorder %s27, 1
      %p239 = por %p237, %p238
      %p241 = scmp.ne.s32.totalorder %s224, %s240
      %p242 = scmp.eq.s32.totalorder %s27, 0
      %p243 = por %p241, %p242
      %s244 = ssub.s32 %s29, %s36
      %p245 = scmp.eq.s32.totalorder %s244, 0
      %s247 = sadd.s32 %s246, 1
      %s248 = scalar_select %p245, %s246, %s247
      %p251 = pneg %p245
      %p252 = scmp.eq.s32.totalorder %s21, 1
      %p253 = por %p251, %p252
      %p254 = scmp.ne.s32.totalorder %s246, %s249
      %p255 = scmp.eq.s32.totalorder %s21, 0
      %p256 = por %p254, %p255
      %p257 = scmp.ne.s32.totalorder %s246, %s249
      %p258 = scmp.eq.s32.totalorder %s26, 1
      %p259 = por %p257, %p258
      %p260 = scmp.ne.s32.totalorder %s249, %s250
      %p261 = scmp.eq.s32.totalorder %s26, 0
      %p262 = por %p260, %p261
      %p263 = scmp.ne.s32.totalorder %s249, %s250
      %p264 = scmp.eq.s32.totalorder %s27, 1
      %p265 = por %p263, %p264
      %p267 = scmp.ne.s32.totalorder %s250, %s266
      %p268 = scmp.eq.s32.totalorder %s27, 0
      %p269 = por %p267, %p268
      %s270 = ssub.s32 %s28, %s40
      %p271 = scmp.eq.s32.totalorder %s270, 0
      %s273 = sadd.s32 %s272, 1
      %s274 = scalar_select %p271, %s272, %s273
      %p277 = pneg %p271
      %p278 = scmp.eq.s32.totalorder %s21, 1
      %p279 = por %p277, %p278
      %p280 = scmp.ne.s32.totalorder %s272, %s275
      %p281 = scmp.eq.s32.totalorder %s21, 0
      %p282 = por %p280, %p281
      %p283 = scmp.ne.s32.totalorder %s272, %s275
      %p284 = scmp.eq.s32.totalorder %s26, 1
      %p285 = por %p283, %p284
      %p286 = scmp.ne.s32.totalorder %s275, %s276
      %p287 = scmp.eq.s32.totalorder %s26, 0
      %p288 = por %p286, %p287
      %p289 = scmp.ne.s32.totalorder %s275, %s276
      %p290 = scmp.eq.s32.totalorder %s27, 1
      %p291 = por %p289, %p290
      %p293 = scmp.ne.s32.totalorder %s276, %s292
      %p294 = scmp.eq.s32.totalorder %s27, 0
      %p295 = por %p293, %p294
      %p296 = scmp.le.s32.totalorder 1, %s21
      %p297 = scmp.lt.s32.totalorder %s21, 3
      %p298 = pnand %p296, %p297
      %p299 = pneg %p298
      // Predicated region
      $region9: #{tpu_custom_call.1} parent=5 // pred_check
        _
      $region10: #{tpu_custom_call.1} parent=5 // pred_check_branch
        %301 = sbr.rel (%p298) target = $region12
      $region11: #{tpu_custom_call.1} parent=5 // pred_region
        %s302 = ssub.s32 %s21, 1
        // Predicated region
        $region13: #{tpu_custom_call.1} parent=11 // pred_check
          %p303 = pneg %p59
        $region14: #{tpu_custom_call.1} parent=11 // pred_check_branch
          %305 = sbr.rel (%p303) target = $region16
        $region15: #{tpu_custom_call.1} parent=11 // pred_region
          %s307 = ssub.s32 1024, 1024
          %308 = vsyncadd [#allocation7], %s307
          %s309 = smul.addr %s30, 128
          %s310 = scalar_lea.hbm %s0, %s309
          %s311 = sshll.u32 [#allocation6], 4
          %s312 = int_to_ptr.vmem [resolvable:$true] %s311
          %317 = dma.hbm_to_vmem [thread:$0]  %s310, 1024, %s312, [#allocation7], 128, 128, 8
        $region16: #{tpu_custom_call.1} parent=11 // pred_fallthru
          _
        // Predicated region
        $region17: #{tpu_custom_call.1} parent=11 // pred_check
          %p318 = pneg %p106
        $region18: #{tpu_custom_call.1} parent=11 // pred_check_branch
          %320 = sbr.rel (%p318) target = $region20
        $region19: #{tpu_custom_call.1} parent=11 // pred_region
          %s322 = ssub.s32 16, 16
          %323 = vsyncadd [#allocation9], %s322
          %326 = dma.hbm_to_smem %s2, 16, [#allocation12], [#allocation9]
        $region20: #{tpu_custom_call.1} parent=11 // pred_fallthru
          _
      $region12: #{tpu_custom_call.1} parent=5 // pred_fallthru
        _
      %p327 = scmp.lt.s32.totalorder %s21, 2
      // Predicated region
      $region21: #{tpu_custom_call.1} parent=5 // pred_check
        %p328 = pneg %p327
      $region22: #{tpu_custom_call.1} parent=5 // pred_check_branch
        %330 = sbr.rel (%p328) target = $region24
      $region23: #{tpu_custom_call.1} parent=5 // pred_region
        // Predicated region
        $region25: #{tpu_custom_call.1} parent=23 // pred_check
          %p331 = pneg %p79
        $region26: #{tpu_custom_call.1} parent=23 // pred_check_branch
          %333 = sbr.rel (%p331) target = $region28
        $region27: #{tpu_custom_call.1} parent=23 // pred_region
          %s334 = sand.u32 %s21, 1
          %s335 = scalar_lea.sflag [#allocation11], %s334
          %s336 = sand.u32 %s69, 1
          %s337 = scalar_lea.vmem [#allocation10], %s336
          %s339 = ssub.s32 16, 16
          %340 = vsyncadd %s335, %s339
          %s341 = smul.addr %s29, 16
          %s342 = scalar_lea.hbm %s1, %s341
          %s344 = sshll.u32 %s337, 4
          %s345 = int_to_ptr.vmem [resolvable:$true] %s344
          %347 = dma.hbm_to_vmem [thread:$0]  %s342, 16, %s345, %s335
        $region28: #{tpu_custom_call.1} parent=23 // pred_fallthru
          _
        // Predicated region
        $region29: #{tpu_custom_call.1} parent=23 // pred_check
          %p348 = pneg %p126
        $region30: #{tpu_custom_call.1} parent=23 // pred_check_branch
          %350 = sbr.rel (%p348) target = $region32
        $region31: #{tpu_custom_call.1} parent=23 // pred_region
          %p351 = scmp.lt.s32.totalorder %s29, 1
          %s352 = scalar_select %p351, %s29, 1
          %s353 = scalar_lea.vmem %s3, %s352
        $region32: #{tpu_custom_call.1} parent=23 // pred_fallthru
          _
        // Predicated region
        $region33: #{tpu_custom_call.1} parent=23 // pred_check
          %p354 = pneg %p152
        $region34: #{tpu_custom_call.1} parent=23 // pred_check_branch
          %356 = sbr.rel (%p354) target = $region36
        $region35: #{tpu_custom_call.1} parent=23 // pred_region
          %p357 = scmp.lt.s32.totalorder %s29, 1
          %s358 = scalar_select %p357, %s29, 1
          %s359 = scalar_lea.vmem %s4, %s358
        $region36: #{tpu_custom_call.1} parent=23 // pred_fallthru
          _
        // Predicated region
        $region37: #{tpu_custom_call.1} parent=23 // pred_check
          %p360 = pneg %p178
        $region38: #{tpu_custom_call.1} parent=23 // pred_check_branch
          %362 = sbr.rel (%p360) target = $region40
        $region39: #{tpu_custom_call.1} parent=23 // pred_region
          %s363 = sand.u32 %s21, 1
          %s364 = scalar_lea.sflag [#allocation11], %s363
          %s365 = sand.u32 %s168, 1
          %s366 = smul.addr %s365, 32
          %s367 = scalar_lea.vmem [#allocation13], %s366
          %s369 = ssub.s32 512, 512
          %370 = vsyncadd %s364, %s369
          %s371 = smul.addr %s29, 4
          %s372 = smul.addr %s371, 128
          %s373 = scalar_lea.hbm %s5, %s372
          %s374 = sshll.u32 %s367, 4
          %s375 = int_to_ptr.vmem [resolvable:$true] %s374
          %380 = dma.hbm_to_vmem [thread:$0]  %s373, 512, %s375, %s364, 128, 128, 8
        $region40: #{tpu_custom_call.1} parent=23 // pred_fallthru
          _
        // Predicated region
        $region41: #{tpu_custom_call.1} parent=23 // pred_check
          %p381 = pneg %p204
        $region42: #{tpu_custom_call.1} parent=23 // pred_check_branch
          %383 = sbr.rel (%p381) target = $region44
        $region43: #{tpu_custom_call.1} parent=23 // pred_region
          %p384 = scmp.lt.s32.totalorder %s29, 1
          %s385 = scalar_select %p384, %s29, 1
          %s386 = scalar_lea.vmem %s6, %s385
        $region44: #{tpu_custom_call.1} parent=23 // pred_fallthru
          _
        // Predicated region
        $region45: #{tpu_custom_call.1} parent=23 // pred_check
          %p387 = pneg %p230
        $region46: #{tpu_custom_call.1} parent=23 // pred_check_branch
          %389 = sbr.rel (%p387) target = $region48
        $region47: #{tpu_custom_call.1} parent=23 // pred_region
          %p390 = scmp.lt.s32.totalorder %s29, 1
          %s391 = scalar_select %p390, %s29, 1
          %s392 = scalar_lea.vmem %s7, %s391
        $region48: #{tpu_custom_call.1} parent=23 // pred_fallthru
          _
        // Predicated region
        $region49: #{tpu_custom_call.1} parent=23 // pred_check
          %p393 = pneg %p256
        $region50: #{tpu_custom_call.1} parent=23 // pred_check_branch
          %395 = sbr.rel (%p393) target = $region52
        $region51: #{tpu_custom_call.1} parent=23 // pred_region
          %p396 = scmp.lt.s32.totalorder %s29, 1
          %s397 = scalar_select %p396, %s29, 1
          %s398 = scalar_lea.vmem %s8, %s397
        $region52: #{tpu_custom_call.1} parent=23 // pred_fallthru
          _
      $region24: #{tpu_custom_call.1} parent=5 // pred_fallthru
        _
      %p399 = scmp.le.s32.totalorder 1, %s21
      %p400 = scmp.lt.s32.totalorder %s21, 3
      %p401 = pnand %p399, %p400
      %p402 = pneg %p401
      // Predicated region
      $region53: #{tpu_custom_call.1} parent=5 // pred_check
        _
      $region54: #{tpu_custom_call.1} parent=5 // pred_check_branch
        %404 = sbr.rel (%p401) target = $region56
      $region55: #{tpu_custom_call.1} parent=5 // pred_region
        %s405 = ssub.s32 %s21, 1
        // Predicated region
        $region57: #{tpu_custom_call.1} parent=55 // pred_check
          %p406 = pneg %p59
        $region58: #{tpu_custom_call.1} parent=55 // pred_check_branch
          %408 = sbr.rel (%p406) target = $region60
        $region59: #{tpu_custom_call.1} parent=55 // pred_region
          %409 = dma.done [#allocation7], 1024
        $region60: #{tpu_custom_call.1} parent=55 // pred_fallthru
          _
        %s410 = sand.u32 %s26, 1
        %s411 = scalar_lea.sflag [#allocation11], %s410
        %s412 = sand.u32 %s72, 1
        %s413 = scalar_lea.vmem [#allocation10], %s412
        // Predicated region
        $region61: #{tpu_custom_call.1} parent=55 // pred_check
          %p414 = pneg %p85
        $region62: #{tpu_custom_call.1} parent=55 // pred_check_branch
          %416 = sbr.rel (%p414) target = $region64
        $region63: #{tpu_custom_call.1} parent=55 // pred_region
          %417 = dma.done %s411, 16
        $region64: #{tpu_custom_call.1} parent=55 // pred_fallthru
          _
        // Predicated region
        $region65: #{tpu_custom_call.1} parent=55 // pred_check
          %p418 = pneg %p106
        $region66: #{tpu_custom_call.1} parent=55 // pred_check_branch
          %420 = sbr.rel (%p418) target = $region68
        $region67: #{tpu_custom_call.1} parent=55 // pred_region
          %421 = dma.done [#allocation9], 16
        $region68: #{tpu_custom_call.1} parent=55 // pred_fallthru
          _
        %s422 = sand.u32 %s26, 1
        %s423 = scalar_lea.sflag [#allocation11], %s422
        %s424 = sand.u32 %s171, 1
        %s425 = smul.addr %s424, 32
        %s426 = scalar_lea.vmem [#allocation13], %s425
        // Predicated region
        $region69: #{tpu_custom_call.1} parent=55 // pred_check
          %p427 = pneg %p184
        $region70: #{tpu_custom_call.1} parent=55 // pred_check_branch
          %429 = sbr.rel (%p427) target = $region72
        $region71: #{tpu_custom_call.1} parent=55 // pred_region
          %430 = dma.done %s423, 512
        $region72: #{tpu_custom_call.1} parent=55 // pred_fallthru
          _
        %431 = sfence
        %p432 = pneg %p59
        %p433 = pneg %p56
        %s434 = sand.u32 %s26, 1
        %s435 = scalar_lea.sflag [#allocation11], %s434
        %s436 = sand.u32 %s72, 1
        %s437 = scalar_lea.vmem [#allocation10], %s436
        %p438 = pneg %p85
        %p439 = pneg %p82
        %p440 = pneg %p106
        %p441 = pneg %p103
        %p442 = scmp.lt.s32.totalorder %s31, 1
        %s443 = scalar_select %p442, %s31, 1
        %s444 = scalar_lea.vmem %s3, %s443
        %p445 = pneg %p132
        %p446 = pneg %p129
        %p447 = scmp.lt.s32.totalorder %s31, 1
        %s448 = scalar_select %p447, %s31, 1
        %s449 = scalar_lea.vmem %s4, %s448
        %p450 = pneg %p158
        %p451 = pneg %p155
        %s452 = sand.u32 %s26, 1
        %s453 = scalar_lea.sflag [#allocation11], %s452
        %s454 = sand.u32 %s171, 1
        %s455 = smul.addr %s454, 32
        %s456 = scalar_lea.vmem [#allocation13], %s455
        %p457 = pneg %p184
        %p458 = pneg %p181
        %p459 = scmp.lt.s32.totalorder %s31, 1
        %s460 = scalar_select %p459, %s31, 1
        %s461 = scalar_lea.vmem %s6, %s460
        %p462 = pneg %p210
        %p463 = pneg %p207
        %p464 = scmp.lt.s32.totalorder %s31, 1
        %s465 = scalar_select %p464, %s31, 1
        %s466 = scalar_lea.vmem %s7, %s465
        %p467 = pneg %p236
        %p468 = pneg %p233
        %p469 = scmp.lt.s32.totalorder %s31, 1
        %s470 = scalar_select %p469, %s31, 1
        %s471 = scalar_lea.vmem %s8, %s470
        %p472 = pneg %p262
        %p473 = pneg %p259
        %p474 = pneg %p288
        %p475 = pneg %p285
        %p476 = scmp.lt.s32.totalorder %s31, 1
        %s477 = scalar_select %p476, %s31, 1
        %s478 = scalar_lea.vmem %s3, %s477
        %p479 = scmp.lt.s32.totalorder %s31, 1
        %s480 = scalar_select %p479, %s31, 1
        %s481 = scalar_lea.vmem %s4, %s480
        %p482 = scmp.lt.s32.totalorder %s31, 1
        %s483 = scalar_select %p482, %s31, 1
        %s484 = scalar_lea.vmem %s6, %s483
        %p485 = scmp.lt.s32.totalorder %s31, 1
        %s486 = scalar_select %p485, %s31, 1
        %s487 = scalar_lea.vmem %s7, %s486
        %p488 = scmp.lt.s32.totalorder %s31, 1
        %s489 = scalar_select %p488, %s31, 1
        %s490 = scalar_lea.vmem %s8, %s489
        %p491 = scmp.eq.s32.totalorder %s31, 0
        // Predicated region
        $region73: #{tpu_custom_call.1} parent=55 // pred_check
          %p492 = pneg %p491
        $region74: #{tpu_custom_call.1} parent=55 // pred_check_branch
          %494 = sbr.rel (%p492) target = $region76
        $region75: #{tpu_custom_call.1} parent=55 // pred_region
          %v495 = vld [vmem:[#allocation6] sm:$0xff]
          %v496 = vld [vmem:[#allocation6 + $0x8] sm:$0xff]
          %v497 = vld [vmem:[#allocation6 + $0x10] sm:$0xff]
          %v498 = vld [vmem:[#allocation6 + $0x18] sm:$0xff]
          %v499 = vld [vmem:[#allocation6 + $0x20] sm:$0xff]
          %v500 = vld [vmem:[#allocation6 + $0x28] sm:$0xff]
          %v501 = vld [vmem:[#allocation6 + $0x30] sm:$0xff]
          %v502 = vld [vmem:[#allocation6 + $0x38] sm:$0xff]
          %vm503 = vcmask 261120
          %504 = vst.msk [vmem:[#allocation2] sm:$0xff] %vm503, %v495
          %505 = vst.msk [vmem:[#allocation2 + $0x8] sm:$0xff] %vm503, %v496
          %506 = vst.msk [vmem:[#allocation2 + $0x10] sm:$0xff] %vm503, %v497
          %507 = vst.msk [vmem:[#allocation2 + $0x18] sm:$0xff] %vm503, %v498
          %508 = vst.msk [vmem:[#allocation2 + $0x20] sm:$0xff] %vm503, %v499
          %509 = vst.msk [vmem:[#allocation2 + $0x28] sm:$0xff] %vm503, %v500
          %510 = vst.msk [vmem:[#allocation2 + $0x30] sm:$0xff] %vm503, %v501
          %511 = vst.msk [vmem:[#allocation2 + $0x38] sm:$0xff] %vm503, %v502
        $region76: #{tpu_custom_call.1} parent=55 // pred_fallthru
          _
        %v512 = vld [vmem:[#allocation2] sm:$0xff]
        %v513 = vld [vmem:[#allocation2 + $0x8] sm:$0xff]
        %v514 = vld [vmem:[#allocation2 + $0x10] sm:$0xff]
        %v515 = vld [vmem:[#allocation2 + $0x18] sm:$0xff]
        %v516 = vld [vmem:[#allocation2 + $0x20] sm:$0xff]
        %v517 = vld [vmem:[#allocation2 + $0x28] sm:$0xff]
        %v518 = vld [vmem:[#allocation2 + $0x30] sm:$0xff]
        %v519 = vld [vmem:[#allocation2 + $0x38] sm:$0xff]
        %v520 = vld [vmem:[%s413] sm:$0x1]
        %s521 = sld [smem:[#allocation12 + %s31]]
        %v522 = vmul.f32 %v512, 1.442695
        %v523 = vpow.pop %v522
        %v524 = vmul.f32 %v513, 1.442695
        %v525 = vpow.pop %v524
        %v526 = vmul.f32 %v514, 1.442695
        %v527 = vpow.pop %v526
        %v528 = vmul.f32 %v515, 1.442695
        %v529 = vpow.pop %v528
        %v530 = vmul.f32 %v516, 1.442695
        %v531 = vpow.pop %v530
        %v532 = vmul.f32 %v517, 1.442695
        %v533 = vpow.pop %v532
        %v534 = vmul.f32 %v518, 1.442695
        %v535 = vpow.pop %v534
        %v536 = vmul.f32 %v519, 1.442695
        %v537 = vpow.pop %v536
        %vm538 = vcmask 261120
        %v539 = vsel %vm538, %v523, 0.0
        %540 = vadd.xlane.f32.xlu0 %v539
        %v541 = vpop.xlane.xlu0 %540
        %v542 = vsel %vm538, %v525, 0.0
        %543 = vadd.xlane.f32.xlu0 %v542
        %v544 = vpop.xlane.xlu0 %543
        %v545 = vsel %vm538, %v527, 0.0
        %546 = vadd.xlane.f32.xlu0 %v545
        %v547 = vpop.xlane.xlu0 %546
        %v548 = vsel %vm538, %v529, 0.0
        %549 = vadd.xlane.f32.xlu0 %v548
        %v550 = vpop.xlane.xlu0 %549
        %v551 = vsel %vm538, %v531, 0.0
        %552 = vadd.xlane.f32.xlu0 %v551
        %v553 = vpop.xlane.xlu0 %552
        %v554 = vsel %vm538, %v533, 0.0
        %555 = vadd.xlane.f32.xlu0 %v554
        %v556 = vpop.xlane.xlu0 %555
        %v557 = vsel %vm538, %v535, 0.0
        %558 = vadd.xlane.f32.xlu0 %v557
        %v559 = vpop.xlane.xlu0 %558
        %v560 = vsel %vm538, %v537, 0.0
        %561 = vadd.xlane.f32.xlu0 %v560
        %v562 = vpop.xlane.xlu0 %561
        %vm563 = vcmask 7168
        %564 = vst.msk [vmem:[#allocation4] sm:$0xff] %vm563, %v541
        %565 = vst.msk [vmem:[#allocation4 + $0x8] sm:$0xff] %vm563, %v544
        %566 = vst.msk [vmem:[#allocation4 + $0x10] sm:$0xff] %vm563, %v547
        %567 = vst.msk [vmem:[#allocation4 + $0x18] sm:$0xff] %vm563, %v550
        %568 = vst.msk [vmem:[#allocation4 + $0x20] sm:$0xff] %vm563, %v553
        %569 = vst.msk [vmem:[#allocation4 + $0x28] sm:$0xff] %vm563, %v556
        %570 = vst.msk [vmem:[#allocation4 + $0x30] sm:$0xff] %vm563, %v559
        %571 = vst.msk [vmem:[#allocation4 + $0x38] sm:$0xff] %vm563, %v562
        %v572 = vmul.f32 %v523, %v512
        %v573 = vmul.f32 %v525, %v513
        %v574 = vmul.f32 %v527, %v514
        %v575 = vmul.f32 %v529, %v515
        %v576 = vmul.f32 %v531, %v516
        %v577 = vmul.f32 %v533, %v517
        %v578 = vmul.f32 %v535, %v518
        %v579 = vmul.f32 %v537, %v519
        %580 = vst.msk [vmem:[#allocation3] sm:$0xff] %vm538, %v572
        %581 = vst.msk [vmem:[#allocation3 + $0x8] sm:$0xff] %vm538, %v573
        %582 = vst.msk [vmem:[#allocation3 + $0x10] sm:$0xff] %vm538, %v574
        %583 = vst.msk [vmem:[#allocation3 + $0x18] sm:$0xff] %vm538, %v575
        %584 = vst.msk [vmem:[#allocation3 + $0x20] sm:$0xff] %vm538, %v576
        %585 = vst.msk [vmem:[#allocation3 + $0x28] sm:$0xff] %vm538, %v577
        %586 = vst.msk [vmem:[#allocation3 + $0x30] sm:$0xff] %vm538, %v578
        %587 = vst.msk [vmem:[#allocation3 + $0x38] sm:$0xff] %vm538, %v579
        %v589 = vlaneseq
        %v590 = vshrl.u32 %v589, 7
        %v591 = vsub.s32 0, %v590
        %v592 = vrot.slane %v520, %v591
        %v594 = vmul.f32 %v512, %v592
        %v595 = vmul.f32 %v513, %v592
        %v596 = vmul.f32 %v514, %v592
        %v597 = vmul.f32 %v515, %v592
        %v598 = vmul.f32 %v516, %v592
        %v599 = vmul.f32 %v517, %v592
        %v600 = vmul.f32 %v518, %v592
        %v601 = vmul.f32 %v519, %v592
        %v602 = vsel %vm538, %v594, 0.0
        %603 = vadd.xlane.f32.xlu0 %v602
        %v604 = vpop.xlane.xlu0 %603
        %v605 = vsel %vm538, %v595, 0.0
        %606 = vadd.xlane.f32.xlu0 %v605
        %v607 = vpop.xlane.xlu0 %606
        %v608 = vsel %vm538, %v596, 0.0
        %609 = vadd.xlane.f32.xlu0 %v608
        %v610 = vpop.xlane.xlu0 %609
        %v611 = vsel %vm538, %v597, 0.0
        %612 = vadd.xlane.f32.xlu0 %v611
        %v613 = vpop.xlane.xlu0 %612
        %v614 = vsel %vm538, %v598, 0.0
        %615 = vadd.xlane.f32.xlu0 %v614
        %v616 = vpop.xlane.xlu0 %615
        %v617 = vsel %vm538, %v599, 0.0
        %618 = vadd.xlane.f32.xlu0 %v617
        %v619 = vpop.xlane.xlu0 %618
        %v620 = vsel %vm538, %v600, 0.0
        %621 = vadd.xlane.f32.xlu0 %v620
        %v622 = vpop.xlane.xlu0 %621
        %v623 = vsel %vm538, %v601, 0.0
        %624 = vadd.xlane.f32.xlu0 %v623
        %v625 = vpop.xlane.xlu0 %624
        %v626 = vstv %s521
        %v627 = vadd.f32 %v604, %v626
        %v628 = vadd.f32 %v607, %v626
        %v629 = vadd.f32 %v610, %v626
        %v630 = vadd.f32 %v613, %v626
        %v631 = vadd.f32 %v616, %v626
        %v632 = vadd.f32 %v619, %v626
        %v633 = vadd.f32 %v622, %v626
        %v634 = vadd.f32 %v625, %v626
        %v635 = vxor.u32 %v627, 2147483648
        %v636 = vxor.u32 %v628, 2147483648
        %v637 = vxor.u32 %v629, 2147483648
        %v638 = vxor.u32 %v630, 2147483648
        %v639 = vxor.u32 %v631, 2147483648
        %v640 = vxor.u32 %v632, 2147483648
        %v641 = vxor.u32 %v633, 2147483648
        %v642 = vxor.u32 %v634, 2147483648
        %v643 = vmul.f32 %v635, 1.442695
        %v644 = vpow.pop %v643
        %v645 = vmul.f32 %v636, 1.442695
        %v646 = vpow.pop %v645
        %v647 = vmul.f32 %v637, 1.442695
        %v648 = vpow.pop %v647
        %v649 = vmul.f32 %v638, 1.442695
        %v650 = vpow.pop %v649
        %v651 = vmul.f32 %v639, 1.442695
        %v652 = vpow.pop %v651
        %v653 = vmul.f32 %v640, 1.442695
        %v654 = vpow.pop %v653
        %v655 = vmul.f32 %v641, 1.442695
        %v656 = vpow.pop %v655
        %v657 = vmul.f32 %v642, 1.442695
        %v658 = vpow.pop %v657
        %v659 = vadd.f32 %v644, 1.0
        %v660 = vadd.f32 %v646, 1.0
        %v661 = vadd.f32 %v648, 1.0
        %v662 = vadd.f32 %v650, 1.0
        %v663 = vadd.f32 %v652, 1.0
        %v664 = vadd.f32 %v654, 1.0
        %v665 = vadd.f32 %v656, 1.0
        %v666 = vadd.f32 %v658, 1.0
        %v667 = vrcp.pop %v659
        %v668 = vmul.f32 1.0, %v667
        %v669 = vrcp.pop %v660
        %v670 = vmul.f32 1.0, %v669
        %v671 = vrcp.pop %v661
        %v672 = vmul.f32 1.0, %v671
        %v673 = vrcp.pop %v662
        %v674 = vmul.f32 1.0, %v673
        %v675 = vrcp.pop %v663
        %v676 = vmul.f32 1.0, %v675
        %v677 = vrcp.pop %v664
        %v678 = vmul.f32 1.0, %v677
        %v679 = vrcp.pop %v665
        %v680 = vmul.f32 1.0, %v679
        %v681 = vrcp.pop %v666
        %v682 = vmul.f32 1.0, %v681
        %683 = vst.msk [vmem:[#allocation5] sm:$0xff] %vm563, %v668
        %684 = vst.msk [vmem:[#allocation5 + $0x8] sm:$0xff] %vm563, %v670
        %685 = vst.msk [vmem:[#allocation5 + $0x10] sm:$0xff] %vm563, %v672
        %686 = vst.msk [vmem:[#allocation5 + $0x18] sm:$0xff] %vm563, %v674
        %687 = vst.msk [vmem:[#allocation5 + $0x20] sm:$0xff] %vm563, %v676
        %688 = vst.msk [vmem:[#allocation5 + $0x28] sm:$0xff] %vm563, %v678
        %689 = vst.msk [vmem:[#allocation5 + $0x30] sm:$0xff] %vm563, %v680
        %690 = vst.msk [vmem:[#allocation5 + $0x38] sm:$0xff] %vm563, %v682
        %v691 = vld [vmem:[#allocation5] sm:$0xff]
        %v692 = vmul.f32 %v691, 0.0
        %v693 = vld [vmem:[#allocation4] sm:$0xff]
        %v694 = vadd.f32 %v692, %v693
        %696 = vset.pattern.permute.xlu0 0
        %697 = vperm.xlu0 %696, %v691
        %v698 = vpop.permute.xlu0 %697
        %v700 = vmul.f32 %v698, 0.0
        %v701 = vld [vmem:[#allocation3] sm:$0xff]
        %v702 = vadd.f32 %v700, %v701
        %v703 = vadd.f32 %v694, 1e-08
        %705 = vset.pattern.permute.xlu0 0
        %706 = vperm.xlu0 %705, %v703
        %v707 = vpop.permute.xlu0 %706
        %v709 = vrcp.pop %v707
        %v710 = vmul.f32 %v702, %v709
        %711 = vst.msk [vmem:[#allocation3] sm:$0xff] %vm538, %v710
        %v712 = vld [vmem:[#allocation5 + $0x8] sm:$0xff]
        %v713 = vmul.f32 %v712, %v694
        %v714 = vld [vmem:[#allocation4 + $0x8] sm:$0xff]
        %v715 = vadd.f32 %v713, %v714
        %717 = vset.pattern.permute.xlu0 0
        %718 = vperm.xlu0 %717, %v712
        %v719 = vpop.permute.xlu0 %718
        %v721 = vmul.f32 %v719, %v702
        %v722 = vld [vmem:[#allocation3 + $0x8] sm:$0xff]
        %v723 = vadd.f32 %v721, %v722
        %v724 = vadd.f32 %v715, 1e-08
        %726 = vset.pattern.permute.xlu0 0
        %727 = vperm.xlu0 %726, %v724
        %v728 = vpop.permute.xlu0 %727
        %v730 = vrcp.pop %v728
        %v731 = vmul.f32 %v723, %v730
        %732 = vst.msk [vmem:[#allocation3 + $0x8] sm:$0xff] %vm538, %v731
        %v733 = vld [vmem:[#allocation5 + $0x10] sm:$0xff]
        %v734 = vmul.f32 %v733, %v715
        %v735 = vld [vmem:[#allocation4 + $0x10] sm:$0xff]
        %v736 = vadd.f32 %v734, %v735
        %738 = vset.pattern.permute.xlu0 0
        %739 = vperm.xlu0 %738, %v733
        %v740 = vpop.permute.xlu0 %739
        %v742 = vmul.f32 %v740, %v723
        %v743 = vld [vmem:[#allocation3 + $0x10] sm:$0xff]
        %v744 = vadd.f32 %v742, %v743
        %v745 = vadd.f32 %v736, 1e-08
        %747 = vset.pattern.permute.xlu0 0
        %748 = vperm.xlu0 %747, %v745
        %v749 = vpop.permute.xlu0 %748
        %v751 = vrcp.pop %v749
        %v752 = vmul.f32 %v744, %v751
        %753 = vst.msk [vmem:[#allocation3 + $0x10] sm:$0xff] %vm538, %v752
        %v754 = vld [vmem:[#allocation5 + $0x18] sm:$0xff]
        %v755 = vmul.f32 %v754, %v736
        %v756 = vld [vmem:[#allocation4 + $0x18] sm:$0xff]
        %v757 = vadd.f32 %v755, %v756
        %759 = vset.pattern.permute.xlu0 0
        %760 = vperm.xlu0 %759, %v754
        %v761 = vpop.permute.xlu0 %760
        %v763 = vmul.f32 %v761, %v744
        %v764 = vld [vmem:[#allocation3 + $0x18] sm:$0xff]
        %v765 = vadd.f32 %v763, %v764
        %v766 = vadd.f32 %v757, 1e-08
        %768 = vset.pattern.permute.xlu0 0
        %769 = vperm.xlu0 %768, %v766
        %v770 = vpop.permute.xlu0 %769
        %v772 = vrcp.pop %v770
        %v773 = vmul.f32 %v765, %v772
        %774 = vst.msk [vmem:[#allocation3 + $0x18] sm:$0xff] %vm538, %v773
        %v775 = vld [vmem:[#allocation5 + $0x20] sm:$0xff]
        %v776 = vmul.f32 %v775, %v757
        %v777 = vld [vmem:[#allocation4 + $0x20] sm:$0xff]
        %v778 = vadd.f32 %v776, %v777
        %780 = vset.pattern.permute.xlu0 0
        %781 = vperm.xlu0 %780, %v775
        %v782 = vpop.permute.xlu0 %781
        %v784 = vmul.f32 %v782, %v765
        %v785 = vld [vmem:[#allocation3 + $0x20] sm:$0xff]
        %v786 = vadd.f32 %v784, %v785
        %v787 = vadd.f32 %v778, 1e-08
        %789 = vset.pattern.permute.xlu0 0
        %790 = vperm.xlu0 %789, %v787
        %v791 = vpop.permute.xlu0 %790
        %v793 = vrcp.pop %v791
        %v794 = vmul.f32 %v786, %v793
        %795 = vst.msk [vmem:[#allocation3 + $0x20] sm:$0xff] %vm538, %v794
        %v796 = vld [vmem:[#allocation5 + $0x28] sm:$0xff]
        %v797 = vmul.f32 %v796, %v778
        %v798 = vld [vmem:[#allocation4 + $0x28] sm:$0xff]
        %v799 = vadd.f32 %v797, %v798
        %801 = vset.pattern.permute.xlu0 0
        %802 = vperm.xlu0 %801, %v796
        %v803 = vpop.permute.xlu0 %802
        %v805 = vmul.f32 %v803, %v786
        %v806 = vld [vmem:[#allocation3 + $0x28] sm:$0xff]
        %v807 = vadd.f32 %v805, %v806
        %v808 = vadd.f32 %v799, 1e-08
        %810 = vset.pattern.permute.xlu0 0
        %811 = vperm.xlu0 %810, %v808
        %v812 = vpop.permute.xlu0 %811
        %v814 = vrcp.pop %v812
        %v815 = vmul.f32 %v807, %v814
        %816 = vst.msk [vmem:[#allocation3 + $0x28] sm:$0xff] %vm538, %v815
        %v817 = vld [vmem:[#allocation5 + $0x30] sm:$0xff]
        %v818 = vmul.f32 %v817, %v799
        %v819 = vld [vmem:[#allocation4 + $0x30] sm:$0xff]
        %v820 = vadd.f32 %v818, %v819
        %822 = vset.pattern.permute.xlu0 0
        %823 = vperm.xlu0 %822, %v817
        %v824 = vpop.permute.xlu0 %823
        %v826 = vmul.f32 %v824, %v807
        %v827 = vld [vmem:[#allocation3 + $0x30] sm:$0xff]
        %v828 = vadd.f32 %v826, %v827
        %v829 = vadd.f32 %v820, 1e-08
        %831 = vset.pattern.permute.xlu0 0
        %832 = vperm.xlu0 %831, %v829
        %v833 = vpop.permute.xlu0 %832
        %v835 = vrcp.pop %v833
        %v836 = vmul.f32 %v828, %v835
        %837 = vst.msk [vmem:[#allocation3 + $0x30] sm:$0xff] %vm538, %v836
        %v838 = vld [vmem:[#allocation5 + $0x38] sm:$0xff]
        %v839 = vmul.f32 %v838, %v820
        %v840 = vld [vmem:[#allocation4 + $0x38] sm:$0xff]
        %v841 = vadd.f32 %v839, %v840
        %843 = vset.pattern.permute.xlu0 0
        %844 = vperm.xlu0 %843, %v838
        %v845 = vpop.permute.xlu0 %844
        %v847 = vmul.f32 %v845, %v828
        %v848 = vld [vmem:[#allocation3 + $0x38] sm:$0xff]
        %v849 = vadd.f32 %v847, %v848
        %v850 = vadd.f32 %v841, 1e-08
        %852 = vset.pattern.permute.xlu0 0
        %853 = vperm.xlu0 %852, %v850
        %v854 = vpop.permute.xlu0 %853
        %v856 = vrcp.pop %v854
        %v857 = vmul.f32 %v849, %v856
        %858 = vst.msk [vmem:[#allocation3 + $0x38] sm:$0xff] %vm538, %v857
        %v859 = vld [vmem:[#allocation3] sm:$0xff]
        %v860 = vld [vmem:[#allocation3 + $0x8] sm:$0xff]
        %v861 = vld [vmem:[#allocation3 + $0x10] sm:$0xff]
        %v862 = vld [vmem:[#allocation3 + $0x18] sm:$0xff]
        %v863 = vld [vmem:[#allocation3 + $0x20] sm:$0xff]
        %v864 = vld [vmem:[#allocation3 + $0x28] sm:$0xff]
        %v865 = vld [vmem:[#allocation3 + $0x30] sm:$0xff]
        %v866 = vld [vmem:[#allocation3 + $0x38] sm:$0xff]
        %v867 = vld [vmem:[%s478] sm:$0x1]
        %v868 = vld [vmem:[%s481] sm:$0x1]
        %v869 = vsel %vm538, %v859, 0.0
        %870 = vadd.xlane.f32.xlu0 %v869
        %v871 = vpop.xlane.xlu0 %870
        %v872 = vsel %vm538, %v860, 0.0
        %873 = vadd.xlane.f32.xlu0 %v872
        %v874 = vpop.xlane.xlu0 %873
        %v875 = vsel %vm538, %v861, 0.0
        %876 = vadd.xlane.f32.xlu0 %v875
        %v877 = vpop.xlane.xlu0 %876
        %v878 = vsel %vm538, %v862, 0.0
        %879 = vadd.xlane.f32.xlu0 %v878
        %v880 = vpop.xlane.xlu0 %879
        %v881 = vsel %vm538, %v863, 0.0
        %882 = vadd.xlane.f32.xlu0 %v881
        %v883 = vpop.xlane.xlu0 %882
        %v884 = vsel %vm538, %v864, 0.0
        %885 = vadd.xlane.f32.xlu0 %v884
        %v886 = vpop.xlane.xlu0 %885
        %v887 = vsel %vm538, %v865, 0.0
        %888 = vadd.xlane.f32.xlu0 %v887
        %v889 = vpop.xlane.xlu0 %888
        %v890 = vsel %vm538, %v866, 0.0
        %891 = vadd.xlane.f32.xlu0 %v890
        %v892 = vpop.xlane.xlu0 %891
        %v893 = vrcp.pop 32.0
        %v894 = vmul.f32 %v871, %v893
        %v895 = vmul.f32 %v874, %v893
        %v896 = vmul.f32 %v877, %v893
        %v897 = vmul.f32 %v880, %v893
        %v898 = vmul.f32 %v883, %v893
        %v899 = vmul.f32 %v886, %v893
        %v900 = vmul.f32 %v889, %v893
        %v901 = vmul.f32 %v892, %v893
        %v902 = vsub.f32 %v859, %v894
        %v903 = vsub.f32 %v860, %v895
        %v904 = vsub.f32 %v861, %v896
        %v905 = vsub.f32 %v862, %v897
        %v906 = vsub.f32 %v863, %v898
        %v907 = vsub.f32 %v864, %v899
        %v908 = vsub.f32 %v865, %v900
        %v909 = vsub.f32 %v866, %v901
        %v910 = vmul.f32 %v902, %v902
        %v911 = vmul.f32 %v903, %v903
        %v912 = vmul.f32 %v904, %v904
        %v913 = vmul.f32 %v905, %v905
        %v914 = vmul.f32 %v906, %v906
        %v915 = vmul.f32 %v907, %v907
        %v916 = vmul.f32 %v908, %v908
        %v917 = vmul.f32 %v909, %v909
        %v918 = vsel %vm538, %v910, 0.0
        %919 = vadd.xlane.f32.xlu0 %v918
        %v920 = vpop.xlane.xlu0 %919
        %v921 = vsel %vm538, %v911, 0.0
        %922 = vadd.xlane.f32.xlu0 %v921
        %v923 = vpop.xlane.xlu0 %922
        %v924 = vsel %vm538, %v912, 0.0
        %925 = vadd.xlane.f32.xlu0 %v924
        %v926 = vpop.xlane.xlu0 %925
        %v927 = vsel %vm538, %v913, 0.0
        %928 = vadd.xlane.f32.xlu0 %v927
        %v929 = vpop.xlane.xlu0 %928
        %v930 = vsel %vm538, %v914, 0.0
        %931 = vadd.xlane.f32.xlu0 %v930
        %v932 = vpop.xlane.xlu0 %931
        %v933 = vsel %vm538, %v915, 0.0
        %934 = vadd.xlane.f32.xlu0 %v933
        %v935 = vpop.xlane.xlu0 %934
        %v936 = vsel %vm538, %v916, 0.0
        %937 = vadd.xlane.f32.xlu0 %v936
        %v938 = vpop.xlane.xlu0 %937
        %v939 = vsel %vm538, %v917, 0.0
        %940 = vadd.xlane.f32.xlu0 %v939
        %v941 = vpop.xlane.xlu0 %940
        %v942 = vmul.f32 %v920, %v893
        %v943 = vmul.f32 %v923, %v893
        %v944 = vmul.f32 %v926, %v893
        %v945 = vmul.f32 %v929, %v893
        %v946 = vmul.f32 %v932, %v893
        %v947 = vmul.f32 %v935, %v893
        %v948 = vmul.f32 %v938, %v893
        %v949 = vmul.f32 %v941, %v893
        %v950 = vadd.f32 %v942, 1e-05
        %v951 = vadd.f32 %v943, 1e-05
        %v952 = vadd.f32 %v944, 1e-05
        %v953 = vadd.f32 %v945, 1e-05
        %v954 = vadd.f32 %v946, 1e-05
        %v955 = vadd.f32 %v947, 1e-05
        %v956 = vadd.f32 %v948, 1e-05
        %v957 = vadd.f32 %v949, 1e-05
        %v958 = vrsqrt.pop %v950
        %v959 = vrsqrt.pop %v951
        %v960 = vrsqrt.pop %v952
        %v961 = vrsqrt.pop %v953
        %v962 = vrsqrt.pop %v954
        %v963 = vrsqrt.pop %v955
        %v964 = vrsqrt.pop %v956
        %v965 = vrsqrt.pop %v957
        %v966 = vmul.f32 %v902, %v958
        %v967 = vmul.f32 %v903, %v959
        %v968 = vmul.f32 %v904, %v960
        %v969 = vmul.f32 %v905, %v961
        %v970 = vmul.f32 %v906, %v962
        %v971 = vmul.f32 %v907, %v963
        %v972 = vmul.f32 %v908, %v964
        %v973 = vmul.f32 %v909, %v965
        %v975 = vlaneseq
        %v976 = vshrl.u32 %v975, 7
        %v977 = vsub.s32 0, %v976
        %v978 = vrot.slane %v867, %v977
        %v980 = vmul.f32 %v966, %v978
        %v981 = vmul.f32 %v967, %v978
        %v982 = vmul.f32 %v968, %v978
        %v983 = vmul.f32 %v969, %v978
        %v984 = vmul.f32 %v970, %v978
        %v985 = vmul.f32 %v971, %v978
        %v986 = vmul.f32 %v972, %v978
        %v987 = vmul.f32 %v973, %v978
        %v989 = vlaneseq
        %v990 = vshrl.u32 %v989, 7
        %v991 = vsub.s32 0, %v990
        %v992 = vrot.slane %v868, %v991
        %v994 = vadd.f32 %v980, %v992
        %v995 = vadd.f32 %v981, %v992
        %v996 = vadd.f32 %v982, %v992
        %v997 = vadd.f32 %v983, %v992
        %v998 = vadd.f32 %v984, %v992
        %v999 = vadd.f32 %v985, %v992
        %v1000 = vadd.f32 %v986, %v992
        %v1001 = vadd.f32 %v987, %v992
        %v1002 = vld [vmem:[%s426] sm:$0xff]
        %v1003 = vld [vmem:[%s426 + $0x8] sm:$0xff]
        %v1004 = vld [vmem:[%s426 + $0x10] sm:$0xff]
        %v1005 = vld [vmem:[%s426 + $0x18] sm:$0xff]
        %v1006 = vld [vmem:[%s484] sm:$0x1]
        %v1008 = vlaneseq
        %v1009 = vshrl.u32 %v1008, 7
        %v1010 = vsub.s32 0, %v1009
        %v1011 = vrot.slane %v1006, %v1010
        %v1014 = vsel %vm538, %v994, 0
        %v1017 = vsel %vm538, %v995, 0
        %v1020 = vsel %vm538, %v996, 0
        %v1023 = vsel %vm538, %v997, 0
        %v1026 = vsel %vm538, %v998, 0
        %v1029 = vsel %vm538, %v999, 0
        %v1032 = vsel %vm538, %v1000, 0
        %v1035 = vsel %vm538, %v1001, 0
        %1037 = vmatprep.subr.mxu0 0.0
        %1038 = vmatpush1.msra.mxu0 0.0
        %1039 = vmatprep.subr.mxu0 0.0
        %1040 = vmatpush1.msra.mxu0 0.0
        %1041 = vmatprep.subr.mxu0 0.0
        %1042 = vmatpush1.msra.mxu0 0.0
        %1043 = vmatprep.subr.mxu0 0.0
        %1044 = vmatpush1.msra.mxu0 0.0
        %1045 = vmatprep.subr.mxu0 0.0
        %1046 = vmatpush1.msra.mxu0 0.0
        %1047 = vmatprep.subr.mxu0 0.0
        %1048 = vmatpush1.msra.mxu0 0.0
        %1049 = vmatprep.subr.mxu0 0.0
        %1050 = vmatpush1.msra.mxu0 0.0
        %1051 = vmatprep.subr.mxu0 0.0
        %1052 = vmatpush1.msra.mxu0 0.0
        %1053 = vmatprep.subr.mxu0 0.0
        %1054 = vmatpush1.msra.mxu0 0.0
        %1055 = vmatprep.subr.mxu0 0.0
        %1056 = vmatpush1.msra.mxu0 0.0
        %1057 = vmatprep.subr.mxu0 0.0
        %1058 = vmatpush1.msra.mxu0 0.0
        %1059 = vmatprep.subr.mxu0 0.0
        %1060 = vmatpush1.msra.mxu0 0.0
        %1061 = vmatprep.subr.mxu0 0.0
        %1062 = vmatpush1.msra.mxu0 %v1005
        %1063 = vmatprep.subr.mxu0 0.0
        %1064 = vmatpush1.msra.mxu0 %v1004
        %1065 = vmatprep.subr.mxu0 0.0
        %1066 = vmatpush1.msra.mxu0 %v1003
        %1067 = vmatprep.subr.mxu0 0.0
        %1068 = vmatpush1.msra.mxu0 %v1002
        %1069 = vmatprep.subr.mxu0 0.0
        %1070 = vmatpush2.msra.mxu0 0.0
        %1071 = vmatprep.subr.mxu0 0.0
        %1072 = vmatpush2.msra.mxu0 0.0
        %1073 = vmatprep.subr.mxu0 0.0
        %1074 = vmatpush2.msra.mxu0 0.0
        %1075 = vmatprep.subr.mxu0 0.0
        %1076 = vmatpush2.msra.mxu0 0.0
        %1077 = vmatprep.subr.mxu0 0.0
        %1078 = vmatpush2.msra.mxu0 0.0
        %1079 = vmatprep.subr.mxu0 0.0
        %1080 = vmatpush2.msra.mxu0 0.0
        %1081 = vmatprep.subr.mxu0 0.0
        %1082 = vmatpush2.msra.mxu0 0.0
        %1083 = vmatprep.subr.mxu0 0.0
        %1084 = vmatpush2.msra.mxu0 0.0
        %1085 = vmatprep.subr.mxu0 0.0
        %1086 = vmatpush2.msra.mxu0 0.0
        %1087 = vmatprep.subr.mxu0 0.0
        %1088 = vmatpush2.msra.mxu0 0.0
        %1089 = vmatprep.subr.mxu0 0.0
        %1090 = vmatpush2.msra.mxu0 0.0
        %1091 = vmatprep.subr.mxu0 0.0
        %1092 = vmatpush2.msra.mxu0 0.0
        %1093 = vmatprep.subr.mxu0 0.0
        %1094 = vmatpush2.msra.mxu0 0.0
        %1095 = vmatprep.subr.mxu0 0.0
        %1096 = vmatpush2.msra.mxu0 0.0
        %1097 = vmatprep.subr.mxu0 0.0
        %1098 = vmatpush2.msra.mxu0 0.0
        %1099 = vmatprep.subr.mxu0 0.0
        %1100 = vmatpush2.msra.mxu0 0.0
        %1101 = vmatprep.mubr.f32.mxu0 0.0
        %1102 = vmatmul.mubr.f32.gmra.mxu0 %v1014
        %v1103 = vpop.f32.mrf.mxu0
        %v1104 = vadd.f32 %v1011, %v1103
        %v1105 = vpop.f32.mrf.mxu0
        %1106 = vmatprep.mubr.f32.mxu0 0.0
        %1107 = vmatmul.mubr.f32.gmra.mxu0 %v1017
        %v1108 = vpop.f32.mrf.mxu0
        %v1109 = vadd.f32 %v1011, %v1108
        %v1110 = vpop.f32.mrf.mxu0
        %1111 = vmatprep.mubr.f32.mxu0 0.0
        %1112 = vmatmul.mubr.f32.gmra.mxu0 %v1020
        %v1113 = vpop.f32.mrf.mxu0
        %v1114 = vadd.f32 %v1011, %v1113
        %v1115 = vpop.f32.mrf.mxu0
        %1116 = vmatprep.mubr.f32.mxu0 0.0
        %1117 = vmatmul.mubr.f32.gmra.mxu0 %v1023
        %v1118 = vpop.f32.mrf.mxu0
        %v1119 = vadd.f32 %v1011, %v1118
        %v1120 = vpop.f32.mrf.mxu0
        %1121 = vmatprep.mubr.f32.mxu0 0.0
        %1122 = vmatmul.mubr.f32.gmra.mxu0 %v1026
        %v1123 = vpop.f32.mrf.mxu0
        %v1124 = vadd.f32 %v1011, %v1123
        %v1125 = vpop.f32.mrf.mxu0
        %1126 = vmatprep.mubr.f32.mxu0 0.0
        %1127 = vmatmul.mubr.f32.gmra.mxu0 %v1029
        %v1128 = vpop.f32.mrf.mxu0
        %v1129 = vadd.f32 %v1011, %v1128
        %v1130 = vpop.f32.mrf.mxu0
        %1131 = vmatprep.mubr.f32.mxu0 0.0
        %1132 = vmatmul.mubr.f32.gmra.mxu0 %v1032
        %v1133 = vpop.f32.mrf.mxu0
        %v1134 = vadd.f32 %v1011, %v1133
        %v1135 = vpop.f32.mrf.mxu0
        %1136 = vmatprep.mubr.f32.mxu0 0.0
        %1137 = vmatmul.mubr.f32.gmra.mxu0 %v1035
        %v1138 = vpop.f32.mrf.mxu0
        %v1139 = vadd.f32 %v1011, %v1138
        %v1140 = vpop.f32.mrf.mxu0
        %1141 = vdwg.mxu0
        %v1142 = vxor.u32 %v1104, 2147483648
        %v1143 = vxor.u32 %v1109, 2147483648
        %v1144 = vxor.u32 %v1114, 2147483648
        %v1145 = vxor.u32 %v1119, 2147483648
        %v1146 = vxor.u32 %v1124, 2147483648
        %v1147 = vxor.u32 %v1129, 2147483648
        %v1148 = vxor.u32 %v1134, 2147483648
        %v1149 = vxor.u32 %v1139, 2147483648
        %v1150 = vmul.f32 %v1142, 1.442695
        %v1151 = vpow.pop %v1150
        %v1152 = vmul.f32 %v1143, 1.442695
        %v1153 = vpow.pop %v1152
        %v1154 = vmul.f32 %v1144, 1.442695
        %v1155 = vpow.pop %v1154
        %v1156 = vmul.f32 %v1145, 1.442695
        %v1157 = vpow.pop %v1156
        %v1158 = vmul.f32 %v1146, 1.442695
        %v1159 = vpow.pop %v1158
        %v1160 = vmul.f32 %v1147, 1.442695
        %v1161 = vpow.pop %v1160
        %v1162 = vmul.f32 %v1148, 1.442695
        %v1163 = vpow.pop %v1162
        %v1164 = vmul.f32 %v1149, 1.442695
        %v1165 = vpow.pop %v1164
        %v1166 = vadd.f32 %v1151, 1.0
        %v1167 = vadd.f32 %v1153, 1.0
        %v1168 = vadd.f32 %v1155, 1.0
        %v1169 = vadd.f32 %v1157, 1.0
        %v1170 = vadd.f32 %v1159, 1.0
        %v1171 = vadd.f32 %v1161, 1.0
        %v1172 = vadd.f32 %v1163, 1.0
        %v1173 = vadd.f32 %v1165, 1.0
        %v1174 = vrcp.pop %v1166
        %v1175 = vmul.f32 1.0, %v1174
        %v1176 = vrcp.pop %v1167
        %v1177 = vmul.f32 1.0, %v1176
        %v1178 = vrcp.pop %v1168
        %v1179 = vmul.f32 1.0, %v1178
        %v1180 = vrcp.pop %v1169
        %v1181 = vmul.f32 1.0, %v1180
        %v1182 = vrcp.pop %v1170
        %v1183 = vmul.f32 1.0, %v1182
        %v1184 = vrcp.pop %v1171
        %v1185 = vmul.f32 1.0, %v1184
        %v1186 = vrcp.pop %v1172
        %v1187 = vmul.f32 1.0, %v1186
        %v1188 = vrcp.pop %v1173
        %v1189 = vmul.f32 1.0, %v1188
        %1198 = vrot.lane.b32.xlu0 %v1104, 96
        %v1199 = vpop.permute.xlu0 %1198
        %1200 = vrot.lane.b32.xlu0 %v1109, 96
        %v1201 = vpop.permute.xlu0 %1200
        %1202 = vrot.lane.b32.xlu0 %v1114, 96
        %v1203 = vpop.permute.xlu0 %1202
        %1204 = vrot.lane.b32.xlu0 %v1119, 96
        %v1205 = vpop.permute.xlu0 %1204
        %1206 = vrot.lane.b32.xlu0 %v1124, 96
        %v1207 = vpop.permute.xlu0 %1206
        %1208 = vrot.lane.b32.xlu0 %v1129, 96
        %v1209 = vpop.permute.xlu0 %1208
        %1210 = vrot.lane.b32.xlu0 %v1134, 96
        %v1211 = vpop.permute.xlu0 %1210
        %1212 = vrot.lane.b32.xlu0 %v1139, 96
        %v1213 = vpop.permute.xlu0 %1212
        %v1222 = vmul.f32 %v1175, %v1199
        %v1223 = vmul.f32 %v1177, %v1201
        %v1224 = vmul.f32 %v1179, %v1203
        %v1225 = vmul.f32 %v1181, %v1205
        %v1226 = vmul.f32 %v1183, %v1207
        %v1227 = vmul.f32 %v1185, %v1209
        %v1228 = vmul.f32 %v1187, %v1211
        %v1229 = vmul.f32 %v1189, %v1213
        %v1230 = vld [vmem:[%s487] sm:$0x1]
        %v1231 = vld [vmem:[%s490] sm:$0x1]
        %v1232 = vsel %vm538, %v1222, 0.0
        %1233 = vadd.xlane.f32.xlu0 %v1232
        %v1234 = vpop.xlane.xlu0 %1233
        %v1235 = vsel %vm538, %v1223, 0.0
        %1236 = vadd.xlane.f32.xlu0 %v1235
        %v1237 = vpop.xlane.xlu0 %1236
        %v1238 = vsel %vm538, %v1224, 0.0
        %1239 = vadd.xlane.f32.xlu0 %v1238
        %v1240 = vpop.xlane.xlu0 %1239
        %v1241 = vsel %vm538, %v1225, 0.0
        %1242 = vadd.xlane.f32.xlu0 %v1241
        %v1243 = vpop.xlane.xlu0 %1242
        %v1244 = vsel %vm538, %v1226, 0.0
        %1245 = vadd.xlane.f32.xlu0 %v1244
        %v1246 = vpop.xlane.xlu0 %1245
        %v1247 = vsel %vm538, %v1227, 0.0
        %1248 = vadd.xlane.f32.xlu0 %v1247
        %v1249 = vpop.xlane.xlu0 %1248
        %v1250 = vsel %vm538, %v1228, 0.0
        %1251 = vadd.xlane.f32.xlu0 %v1250
        %v1252 = vpop.xlane.xlu0 %1251
        %v1253 = vsel %vm538, %v1229, 0.0
        %1254 = vadd.xlane.f32.xlu0 %v1253
        %v1255 = vpop.xlane.xlu0 %1254
        %v1256 = vmul.f32 %v1234, %v893
        %v1257 = vmul.f32 %v1237, %v893
        %v1258 = vmul.f32 %v1240, %v893
        %v1259 = vmul.f32 %v1243, %v893
        %v1260 = vmul.f32 %v1246, %v893
        %v1261 = vmul.f32 %v1249, %v893
        %v1262 = vmul.f32 %v1252, %v893
        %v1263 = vmul.f32 %v1255, %v893
        %v1264 = vsub.f32 %v1222, %v1256
        %v1265 = vsub.f32 %v1223, %v1257
        %v1266 = vsub.f32 %v1224, %v1258
        %v1267 = vsub.f32 %v1225, %v1259
        %v1268 = vsub.f32 %v1226, %v1260
        %v1269 = vsub.f32 %v1227, %v1261
        %v1270 = vsub.f32 %v1228, %v1262
        %v1271 = vsub.f32 %v1229, %v1263
        %v1272 = vmul.f32 %v1264, %v1264
        %v1273 = vmul.f32 %v1265, %v1265
        %v1274 = vmul.f32 %v1266, %v1266
        %v1275 = vmul.f32 %v1267, %v1267
        %v1276 = vmul.f32 %v1268, %v1268
        %v1277 = vmul.f32 %v1269, %v1269
        %v1278 = vmul.f32 %v1270, %v1270
        %v1279 = vmul.f32 %v1271, %v1271
        %v1280 = vsel %vm538, %v1272, 0.0
        %1281 = vadd.xlane.f32.xlu0 %v1280
        %v1282 = vpop.xlane.xlu0 %1281
        %v1283 = vsel %vm538, %v1273, 0.0
        %1284 = vadd.xlane.f32.xlu0 %v1283
        %v1285 = vpop.xlane.xlu0 %1284
        %v1286 = vsel %vm538, %v1274, 0.0
        %1287 = vadd.xlane.f32.xlu0 %v1286
        %v1288 = vpop.xlane.xlu0 %1287
        %v1289 = vsel %vm538, %v1275, 0.0
        %1290 = vadd.xlane.f32.xlu0 %v1289
        %v1291 = vpop.xlane.xlu0 %1290
        %v1292 = vsel %vm538, %v1276, 0.0
        %1293 = vadd.xlane.f32.xlu0 %v1292
        %v1294 = vpop.xlane.xlu0 %1293
        %v1295 = vsel %vm538, %v1277, 0.0
        %1296 = vadd.xlane.f32.xlu0 %v1295
        %v1297 = vpop.xlane.xlu0 %1296
        %v1298 = vsel %vm538, %v1278, 0.0
        %1299 = vadd.xlane.f32.xlu0 %v1298
        %v1300 = vpop.xlane.xlu0 %1299
        %v1301 = vsel %vm538, %v1279, 0.0
        %1302 = vadd.xlane.f32.xlu0 %v1301
        %v1303 = vpop.xlane.xlu0 %1302
        %v1304 = vmul.f32 %v1282, %v893
        %v1305 = vmul.f32 %v1285, %v893
        %v1306 = vmul.f32 %v1288, %v893
        %v1307 = vmul.f32 %v1291, %v893
        %v1308 = vmul.f32 %v1294, %v893
        %v1309 = vmul.f32 %v1297, %v893
        %v1310 = vmul.f32 %v1300, %v893
        %v1311 = vmul.f32 %v1303, %v893
        %v1312 = vadd.f32 %v1304, 1e-05
        %v1313 = vadd.f32 %v1305, 1e-05
        %v1314 = vadd.f32 %v1306, 1e-05
        %v1315 = vadd.f32 %v1307, 1e-05
        %v1316 = vadd.f32 %v1308, 1e-05
        %v1317 = vadd.f32 %v1309, 1e-05
        %v1318 = vadd.f32 %v1310, 1e-05
        %v1319 = vadd.f32 %v1311, 1e-05
        %v1320 = vrsqrt.pop %v1312
        %v1321 = vrsqrt.pop %v1313
        %v1322 = vrsqrt.pop %v1314
        %v1323 = vrsqrt.pop %v1315
        %v1324 = vrsqrt.pop %v1316
        %v1325 = vrsqrt.pop %v1317
        %v1326 = vrsqrt.pop %v1318
        %v1327 = vrsqrt.pop %v1319
        %v1328 = vmul.f32 %v1264, %v1320
        %v1329 = vmul.f32 %v1265, %v1321
        %v1330 = vmul.f32 %v1266, %v1322
        %v1331 = vmul.f32 %v1267, %v1323
        %v1332 = vmul.f32 %v1268, %v1324
        %v1333 = vmul.f32 %v1269, %v1325
        %v1334 = vmul.f32 %v1270, %v1326
        %v1335 = vmul.f32 %v1271, %v1327
        %v1337 = vlaneseq
        %v1338 = vshrl.u32 %v1337, 7
        %v1339 = vsub.s32 0, %v1338
        %v1340 = vrot.slane %v1230, %v1339
        %v1342 = vmul.f32 %v1328, %v1340
        %v1343 = vmul.f32 %v1329, %v1340
        %v1344 = vmul.f32 %v1330, %v1340
        %v1345 = vmul.f32 %v1331, %v1340
        %v1346 = vmul.f32 %v1332, %v1340
        %v1347 = vmul.f32 %v1333, %v1340
        %v1348 = vmul.f32 %v1334, %v1340
        %v1349 = vmul.f32 %v1335, %v1340
        %v1351 = vlaneseq
        %v1352 = vshrl.u32 %v1351, 7
        %v1353 = vsub.s32 0, %v1352
        %v1354 = vrot.slane %v1231, %v1353
        %v1356 = vadd.f32 %v1342, %v1354
        %v1357 = vadd.f32 %v1343, %v1354
        %v1358 = vadd.f32 %v1344, %v1354
        %v1359 = vadd.f32 %v1345, %v1354
        %v1360 = vadd.f32 %v1346, %v1354
        %v1361 = vadd.f32 %v1347, %v1354
        %v1362 = vadd.f32 %v1348, %v1354
        %v1363 = vadd.f32 %v1349, %v1354
        %v1364 = vadd.f32 %v512, %v1356
        %v1365 = vadd.f32 %v513, %v1357
        %v1366 = vadd.f32 %v514, %v1358
        %v1367 = vadd.f32 %v515, %v1359
        %v1368 = vadd.f32 %v516, %v1360
        %v1369 = vadd.f32 %v517, %v1361
        %v1370 = vadd.f32 %v518, %v1362
        %v1371 = vadd.f32 %v519, %v1363
        %1372 = vst.msk [vmem:[#allocation2] sm:$0xff] %vm538, %v1364
        %1373 = vst.msk [vmem:[#allocation2 + $0x8] sm:$0xff] %vm538, %v1365
        %1374 = vst.msk [vmem:[#allocation2 + $0x10] sm:$0xff] %vm538, %v1366
        %1375 = vst.msk [vmem:[#allocation2 + $0x18] sm:$0xff] %vm538, %v1367
        %1376 = vst.msk [vmem:[#allocation2 + $0x20] sm:$0xff] %vm538, %v1368
        %1377 = vst.msk [vmem:[#allocation2 + $0x28] sm:$0xff] %vm538, %v1369
        %1378 = vst.msk [vmem:[#allocation2 + $0x30] sm:$0xff] %vm538, %v1370
        %1379 = vst.msk [vmem:[#allocation2 + $0x38] sm:$0xff] %vm538, %v1371
        %p1380 = scmp.eq.s32.totalorder %s31, 1
        // Predicated region
        $region77: #{tpu_custom_call.1} parent=55 // pred_check
          %p1381 = pneg %p1380
        $region78: #{tpu_custom_call.1} parent=55 // pred_check_branch
          %1383 = sbr.rel (%p1381) target = $region80
        $region79: #{tpu_custom_call.1} parent=55 // pred_region
          %v1384 = vld [vmem:[#allocation2 + $0x38] sm:$0xff]
          %1385 = vst.msk [vmem:[#allocation14] sm:$0xff] %vm538, %v1384
        $region80: #{tpu_custom_call.1} parent=55 // pred_fallthru
          _
        // Predicated region
        $region81: #{tpu_custom_call.1} parent=55 // pred_check
          %p1386 = pneg %p285
        $region82: #{tpu_custom_call.1} parent=55 // pred_check_branch
          %1388 = sbr.rel (%p1386) target = $region84
        $region83: #{tpu_custom_call.1} parent=55 // pred_region
          %s1390 = ssub.s32 128, 128
          %1391 = vsyncadd [#allocation8], %s1390
          %s1392 = smul.addr %s30, 128
          %s1393 = scalar_lea.hbm %s9, %s1392
          %s1395 = sshll.u32 [#allocation14], 4
          %s1396 = int_to_ptr.vmem [resolvable:$true] %s1395
          %1398 = dma.vmem_to_hbm [thread:$0]  %s1396, 128, %s1393, [#allocation8]
        $region84: #{tpu_custom_call.1} parent=55 // pred_fallthru
          _
        // Predicated region
        $region85: #{tpu_custom_call.1} parent=55 // pred_check
          %p1399 = pneg %p285
        $region86: #{tpu_custom_call.1} parent=55 // pred_check_branch
          %1401 = sbr.rel (%p1399) target = $region88
        $region87: #{tpu_custom_call.1} parent=55 // pred_region
          %1402 = dma.done [#allocation8], 128
        $region88: #{tpu_custom_call.1} parent=55 // pred_fallthru
          _
      $region56: #{tpu_custom_call.1} parent=5 // pred_fallthru
        _
      %p1403 = scmp.le.s32.totalorder 2, %s21
      // Predicated region
      $region89: #{tpu_custom_call.1} parent=5 // pred_check
        %p1404 = pneg %p1403
      $region90: #{tpu_custom_call.1} parent=5 // pred_check_branch
        %1406 = sbr.rel (%p1404) target = $region92
      $region91: #{tpu_custom_call.1} parent=5 // pred_region
        %s1407 = ssub.s32 %s21, 2
      $region92: #{tpu_custom_call.1} parent=5 // pred_fallthru
        _
    $region6: #{tpu_custom_call.1} parent=1 // loop_footer
      %s25 = sadd.s32 1, %s21
    $region7: #{tpu_custom_call.1} parent=1 // loop_footer_branch
      %20 = sbr.rel target = $region3
    $region8: #{tpu_custom_call.1} parent=1 // loop_exit
      _
    %1408 = vsyncpa [#allocation7], 1
    %s1409 = scalar_lea.sflag [#allocation7], 1
    %1410 = vsyncpa %s1409, 1
    %1411 = vsyncpa [#allocation11], 1
    %s1412 = scalar_lea.sflag [#allocation11], 1
    %1413 = vsyncpa %s1412, 1
    %1414 = vsyncpa [#allocation8], 1
    %s1415 = scalar_lea.sflag [#allocation8], 1
    %1416 = vsyncpa %s1415, 1
    %1417 = vsyncpa [#allocation9], 1
    %s1418 = scalar_lea.sflag [#allocation9], 1
    %1419 = vsyncpa %s1418, 1

</llo_original>
